<compile_context>
chip_gen: v6e
topology: v6e:2x2x1
jax: 0.10.0
libtpu: 0.0.40
codegen_flags: <defaults>
</compile_context>

<pallas_src>
import functools

import jax
import jax.numpy as jnp
from jax.experimental import pallas as pl
from jax.experimental.pallas import tpu as pltpu

_LOG2E = 1.4426950408889634


def _attn_block_kernel(x_full_ref, x_tile_ref, wq_ref, bq_ref, wkv_ref,
                       bkv_ref, wo_ref, bo_ref, o_ref, kv_ref, ctx_ref,
                       *, num_heads, compute_dtype):
    """Grid = (batch, query_tile).  Shapes seen by the kernel:
         x_full_ref : (1, S, E)   compute_dtype  -- K/V projection input
         x_tile_ref : (1, TQ, E)  input dtype    -- Q projection + residual
         kv_ref     : (S, 2E)     compute_dtype scratch, [K | V], filled at qi==0
         ctx_ref    : (TQ, E)     f32 scratch    -- per-head contexts
    """
    E = x_tile_ref.shape[2]
    D = E // num_heads
    qi = pl.program_id(1)

    # K/V projection for the full sequence, once per batch element.  This is
    # only correct because the query-tile axis is 'arbitrary' (sequential,
    # innermost) -- do NOT mark it 'parallel' or reorder the grid.
    @pl.when(qi == 0)
    def _():
        kv = jnp.dot(x_full_ref[0], wkv_ref[...],
                     preferred_element_type=jnp.float32) + bkv_ref[...]
        kv_ref[...] = kv.astype(kv_ref.dtype)                      # (S, 2E)

    # Per-tile Q projection from the residual tile (spreads 1/3 of the
    # projection FLOPs across grid steps).  log2(e)/sqrt(D) is pre-folded
    # into wq / bq at parameter-prep time (zero in-kernel cost).
    x_t = x_tile_ref[0]                                            # (TQ, E)
    q_tile = (jnp.dot(x_t.astype(compute_dtype), wq_ref[...],
                      preferred_element_type=jnp.float32)
              + bq_ref[...]).astype(compute_dtype)                 # (TQ, E)

    # Per-head attention over the FULL key length (softmax stays exact under
    # query tiling).  Static head loop: static lane slices are free.
    # TODO(synk): for num_heads >= 16 switch to lax.fori_loop over a
    # head-major (H, S, D) K/V layout to bound live ranges.
    for h in range(num_heads):
        lo = h * D
        q_h = q_tile[:, lo:lo + D]                                 # (TQ, D)
        k_h = kv_ref[:, lo:lo + D]                                 # (S, D)
        v_h = kv_ref[:, E + lo:E + lo + D]                         # (S, D)

        scores = jax.lax.dot_general(
            q_h, k_h, (((1,), (1,)), ((), ())),
            preferred_element_type=jnp.float32)                    # (TQ, S)
        m = jnp.max(scores, axis=-1, keepdims=True)
        # exp2: the multiply by log2(e) already lives in wq / bq.
        # TODO(synk): on v6e/v7x this exp could run in bf16 for 2x EUP rate.
        p = jnp.exp2(scores - m)
        l = jnp.sum(p, axis=-1, keepdims=True)
        ctx_h = jnp.dot(p.astype(compute_dtype), v_h,
                        preferred_element_type=jnp.float32)        # (TQ, D)
        # Normalize the small (TQ, D) context with an EUP approx reciprocal
        # instead of dividing the (TQ, S) probabilities.
        ctx_ref[:, lo:lo + D] = ctx_h * pl.reciprocal(l, approx=True)
        # TODO(synk): attention-weight dropout omitted (eval/inference semantics).

    attn = jnp.dot(ctx_ref[...].astype(compute_dtype), wo_ref[...],
                   preferred_element_type=jnp.float32) + bo_ref[...]   # (TQ, E)
    o_ref[0] = (x_t.astype(jnp.float32) + attn).astype(o_ref.dtype)


def prepare_attention_params(params, embed_dim, num_heads,
                             compute_dtype=jnp.bfloat16):
    """One-time weight prep: split Q vs. fused K/V, fold log2(e)/sqrt(D) into
    Wq/bq, transpose to (in, out) layout, cast to the compute dtype."""
    E = embed_dim
    D = E // num_heads
    scale = _LOG2E / float(D) ** 0.5

    in_w = params["in_proj_weight"]            # (3E, E), rows = [q; k; v]
    in_b = params["in_proj_bias"]              # (3E,)

    w_q = (in_w[:E].T * scale).astype(compute_dtype)               # (E, E)
    b_q = (in_b[:E] * scale).reshape(1, E).astype(jnp.float32)
    # TODO(synk): optional per-head column permutation of w_kv to keep D<128
    # head slices lane-aligned; [K | V] layout kept here.
    w_kv = in_w[E:].T.astype(compute_dtype)                        # (E, 2E)
    b_kv = in_b[E:].reshape(1, 2 * E).astype(jnp.float32)
    w_o = params["out_proj_weight"].T.astype(compute_dtype)        # (E, E)
    b_o = params["out_proj_bias"].reshape(1, E).astype(jnp.float32)
    return {"w_q": w_q, "b_q": b_q, "w_kv": w_kv, "b_kv": b_kv,
            "w_o": w_o, "b_o": b_o}


def _vmem_budget_bytes():
    cap = 64 * 1024 * 1024          # conservative default (v7x per-TC VMEM)
    try:
        cap = int(pltpu.get_tpu_info().vmem_capacity_bytes)
    except Exception:
        pass
    # ~20% headroom for compiler-internal scratch / spills:
    #   v7x (64 MiB) -> ~51 MiB; v5e/v6e (128 MiB) -> ~102 MiB.
    return int(cap * 0.8)


def residual_attention_block(x, prepared, num_heads, *, tq=None,
                             compute_dtype=jnp.bfloat16,
                             single_buffer_weights=True):
    """x: (B, S, E).  `prepared` comes from prepare_attention_params()."""
    B, S, E = x.shape
    assert E % num_heads == 0
    if tq is None:
        tq = S if S <= 256 else 256
    assert S % tq == 0 and (tq % 8 == 0 or tq == S), "bad query tile"
    n_q = S // tq

    kernel = functools.partial(_attn_block_kernel, num_heads=num_heads,
                               compute_dtype=compute_dtype)

    cd = jnp.dtype(compute_dtype).itemsize
    xb = jnp.dtype(x.dtype).itemsize

    def const_spec(shape):
        idx = lambda b, q: (0,) * len(shape)
        if single_buffer_weights and hasattr(pl, "Buffered"):
            # Grid-invariant blocks: double-buffering them wastes VMEM.
            return pl.BlockSpec(shape, idx, pipeline_mode=pl.Buffered(1))
        return pl.BlockSpec(shape, idx)

    wbuf = 1 if single_buffer_weights else 2
    est = (2 * S * E * cd                      # full-x (bf16) block, double-buffered
           + 2 * tq * E * xb                   # residual / Q tile, double-buffered
           + wbuf * 4 * E * E * cd             # w_q + w_kv + w_o
           + wbuf * 4 * E * 4                  # biases (f32)
           + 2 * tq * E * xb                   # output tile, double-buffered
           + S * 2 * E * cd                    # K/V scratch
           + tq * E * 4)                       # ctx scratch
    vmem_limit = int(min(_vmem_budget_bytes(),
                         max(2 * est, 16 * 1024 * 1024)))

    flops = int(2 * B * S * E * 3 * E          # QKV projections
                + 4 * B * S * S * E            # scores + p@v (all heads)
                + 2 * B * S * E * E)           # output projection
    cost = pl.CostEstimate(
        flops=flops,
        transcendentals=int(B * num_heads * S * S),
        bytes_accessed=int(B * S * E * (xb + cd)       # x (f32 tiles + bf16 full)
                           + B * S * E * xb            # output
                           + 4 * E * E * cd + 4 * E * 4))

    return pl.pallas_call(
        kernel,
        out_shape=jax.ShapeDtypeStruct((B, S, E), x.dtype),
        grid_spec=pltpu.PrefetchScalarGridSpec(
            num_scalar_prefetch=0,
            grid=(B, n_q),
            in_specs=[
                pl.BlockSpec((1, S, E), lambda b, q: (b, 0, 0)),    # x full (bf16)
                pl.BlockSpec((1, tq, E), lambda b, q: (b, q, 0)),   # x tile (residual+Q)
                const_spec((E, E)),                                 # w_q (scale folded)
                const_spec((1, E)),                                 # b_q
                const_spec((E, 2 * E)),                             # w_kv
                const_spec((1, 2 * E)),                             # b_kv
                const_spec((E, E)),                                 # w_o
                const_spec((1, E)),                                 # b_o
            ],
            out_specs=pl.BlockSpec((1, tq, E), lambda b, q: (b, q, 0)),
            scratch_shapes=[
                pltpu.VMEM((S, 2 * E), compute_dtype),              # K/V
                pltpu.VMEM((tq, E), jnp.float32),                   # ctx
            ],
        ),
        compiler_params=pltpu.CompilerParams(
            # Batch axis shards across TensorCores; the query-tile axis MUST
            # stay sequential ('arbitrary'): the K/V scratch is filled at qi==0.
            dimension_semantics=("parallel", "arbitrary"),
            vmem_limit_bytes=vmem_limit,
        ),
        cost_estimate=cost,
    )(x.astype(compute_dtype), x, prepared["w_q"], prepared["b_q"],
      prepared["w_kv"], prepared["b_kv"], prepared["w_o"], prepared["b_o"])


def _reference(x, params, num_heads):
    """Pure-JAX f32 reference of nn.MultiheadAttention (eval) + residual."""
    B, S, E = x.shape
    D = E // num_heads
    in_w, in_b = params["in_proj_weight"], params["in_proj_bias"]
    out_w, out_b = params["out_proj_weight"], params["out_proj_bias"]
    qkv = jnp.einsum("bse,fe->bsf", x, in_w) + in_b               # (B, S, 3E)
    q, k, v = jnp.split(qkv, 3, axis=-1)

    def heads(t):
        return t.reshape(B, S, num_heads, D).transpose(0, 2, 1, 3)

    q, k, v = heads(q), heads(k), heads(v)
    scores = jnp.einsum("bhqd,bhkd->bhqk", q, k) / jnp.sqrt(D)
    p = jax.nn.softmax(scores, axis=-1)
    ctx = jnp.einsum("bhqk,bhkd->bhqd", p, v).transpose(0, 2, 1, 3).reshape(B, S, E)
    return x + jnp.einsum("bse,fe->bsf", ctx, out_w) + out_b


if __name__ == "__main__":
    B, S, E, H = 2, 16, 32, 4
    TQ = 8                                   # two query tiles per sequence
    key = jax.random.PRNGKey(0)
    k_x, k_inw, k_outw = jax.random.split(key, 3)

    x = jax.random.normal(k_x, (B, S, E), dtype=jnp.float32)

    # Deterministic parameter init mirroring nn.MultiheadAttention structure.
    lim_in = (6.0 / (3 * E + E)) ** 0.5
    lim_out = (6.0 / (E + E)) ** 0.5
    params = {
        "in_proj_weight": jax.random.uniform(k_inw, (3 * E, E), jnp.float32,
                                             -lim_in, lim_in),
        "in_proj_bias": 0.02 * jax.random.normal(jax.random.PRNGKey(1),
                                                 (3 * E,), jnp.float32),
        "out_proj_weight": jax.random.uniform(k_outw, (E, E), jnp.float32,
                                              -lim_out, lim_out),
        "out_proj_bias": 0.02 * jax.random.normal(jax.random.PRNGKey(2),
                                                  (E,), jnp.float32),
    }

    prepared = prepare_attention_params(params, E, H)   # one-time weight prep
    try:
        out = jax.block_until_ready(
            residual_attention_block(x, prepared, H, tq=TQ))
    except Exception:
        # Fallback if single-buffered (Buffered(1)) weight specs are rejected
        # by this Pallas/Mosaic version.
        out = jax.block_until_ready(
            residual_attention_block(x, prepared, H, tq=TQ,
                                     single_buffer_weights=False))

    ref = _reference(x, params, H)
    assert out.shape == (B, S, E)
    # bf16 matmuls + approx reciprocal vs f32 reference -> modest tolerance.
    assert jnp.allclose(out, ref, atol=3e-2, rtol=3e-2), "mismatch vs reference"

    print("KERNEL_OK")
</pallas_src>

<mosaic_0001>
module attributes {stable_mosaic.version = 11 : i64} {
  func.func @_attn_block_kernel(%arg0: i32, %arg1: i32, %arg2: memref<1x16x32xbf16, #tpu.memory_space<vmem>>, %arg3: memref<1x8x32xf32, #tpu.memory_space<vmem>>, %arg4: memref<32x32xbf16, #tpu.memory_space<vmem>>, %arg5: memref<1x32xf32, #tpu.memory_space<vmem>>, %arg6: memref<32x64xbf16, #tpu.memory_space<vmem>>, %arg7: memref<1x64xf32, #tpu.memory_space<vmem>>, %arg8: memref<32x32xbf16, #tpu.memory_space<vmem>>, %arg9: memref<1x32xf32, #tpu.memory_space<vmem>>, %arg10: memref<1x8x32xf32, #tpu.memory_space<vmem>>, %arg11: memref<16x64xbf16, #tpu.memory_space<vmem>>, %arg12: memref<8x32xf32, #tpu.memory_space<vmem>>) attributes {dimension_semantics = [#tpu.dimension_semantics<parallel>, #tpu.dimension_semantics<arbitrary>], iteration_bounds = array<i64: 2, 2>, scalar_prefetch = 0 : i64, scratch_operands = 2 : i64, tpu.core_type = #tpu.core_type<tc>, window_params = [{transform_indices = @transform_0, window_bounds = array<i64: 1, 16, 32>}, {transform_indices = @transform_1, window_bounds = array<i64: 1, 8, 32>}, {pipeline_mode = #tpu.pipeline_mode<synchronous>, transform_indices = @transform_2, window_bounds = array<i64: 32, 32>}, {pipeline_mode = #tpu.pipeline_mode<synchronous>, transform_indices = @transform_3, window_bounds = array<i64: 1, 32>}, {pipeline_mode = #tpu.pipeline_mode<synchronous>, transform_indices = @transform_4, window_bounds = array<i64: 32, 64>}, {pipeline_mode = #tpu.pipeline_mode<synchronous>, transform_indices = @transform_5, window_bounds = array<i64: 1, 64>}, {pipeline_mode = #tpu.pipeline_mode<synchronous>, transform_indices = @transform_6, window_bounds = array<i64: 32, 32>}, {pipeline_mode = #tpu.pipeline_mode<synchronous>, transform_indices = @transform_7, window_bounds = array<i64: 1, 32>}, {transform_indices = @transform_8, window_bounds = array<i64: 1, 8, 32>}]} {
    %c0_i32 = arith.constant 0 : i32
    %0 = arith.cmpi eq, %arg1, %c0_i32 : i32
    %1 = arith.extui %0 : i1 to i32
    %c0_i32_0 = arith.constant 0 : i32
    %2 = arith.cmpi ne, %1, %c0_i32_0 : i32
    scf.if %2 {
      %c0_50 = arith.constant 0 : index
      %c0_51 = arith.constant 0 : index
      %c0_52 = arith.constant 0 : index
      %91 = vector.load %arg2[%c0_50, %c0_51, %c0_52] : memref<1x16x32xbf16, #tpu.memory_space<vmem>>, vector<1x16x32xbf16>
      %92 = vector.shape_cast %91 : vector<1x16x32xbf16> to vector<16x32xbf16>
      %c0_53 = arith.constant 0 : index
      %c0_54 = arith.constant 0 : index
      %93 = vector.load %arg6[%c0_53, %c0_54] : memref<32x64xbf16, #tpu.memory_space<vmem>>, vector<32x64xbf16>
      %cst_55 = arith.constant dense<0.000000e+00> : vector<16x64xf32>
      %94 = tpu.matmul %92, %93, %cst_55 {dimension_numbers = #tpu.dot_dimension_numbers<[1], [0], [0], [1], [0, 0, 1, 1], [], []>} : vector<16x32xbf16>, vector<32x64xbf16>, vector<16x64xf32> -> vector<16x64xf32>
      %c0_56 = arith.constant 0 : index
      %c0_57 = arith.constant 0 : index
      %95 = vector.load %arg7[%c0_56, %c0_57] : memref<1x64xf32, #tpu.memory_space<vmem>>, vector<1x64xf32>
      %96 = vector.broadcast %95 : vector<1x64xf32> to vector<16x64xf32>
      %97 = arith.addf %94, %96 : vector<16x64xf32>
      %98 = arith.truncf %97 : vector<16x64xf32> to vector<16x64xbf16>
      %c0_58 = arith.constant 0 : index
      %c0_59 = arith.constant 0 : index
      %99 = vector.load %arg11[%c0_58, %c0_59] : memref<16x64xbf16, #tpu.memory_space<vmem>>, vector<16x64xbf16>
      tpu.vector_store %arg11[%c0_58, %c0_59], %98 {strides = array<i32>} : memref<16x64xbf16, #tpu.memory_space<vmem>>, vector<16x64xbf16>,
    } else {
    }
    %c0 = arith.constant 0 : index
    %c0_1 = arith.constant 0 : index
    %c0_2 = arith.constant 0 : index
    %3 = vector.load %arg3[%c0, %c0_1, %c0_2] : memref<1x8x32xf32, #tpu.memory_space<vmem>>, vector<1x8x32xf32>
    %4 = vector.shape_cast %3 : vector<1x8x32xf32> to vector<8x32xf32>
    %5 = arith.truncf %4 : vector<8x32xf32> to vector<8x32xbf16>
    %c0_3 = arith.constant 0 : index
    %c0_4 = arith.constant 0 : index
    %6 = vector.load %arg4[%c0_3, %c0_4] : memref<32x32xbf16, #tpu.memory_space<vmem>>, vector<32x32xbf16>
    %cst = arith.constant dense<0.000000e+00> : vector<8x32xf32>
    %7 = tpu.matmul %5, %6, %cst {dimension_numbers = #tpu.dot_dimension_numbers<[1], [0], [0], [1], [0, 0, 1, 1], [], []>} : vector<8x32xbf16>, vector<32x32xbf16>, vector<8x32xf32> -> vector<8x32xf32>
    %c0_5 = arith.constant 0 : index
    %c0_6 = arith.constant 0 : index
    %8 = vector.load %arg5[%c0_5, %c0_6] : memref<1x32xf32, #tpu.memory_space<vmem>>, vector<1x32xf32>
    %9 = vector.broadcast %8 : vector<1x32xf32> to vector<8x32xf32>
    %10 = arith.addf %7, %9 : vector<8x32xf32>
    %11 = arith.truncf %10 : vector<8x32xf32> to vector<8x32xbf16>
    %12 = vector.extract_strided_slice %11 {offsets = [0, 0], sizes = [8, 8], strides = [1, 1]} : vector<8x32xbf16> to vector<8x8xbf16>
    %c0_7 = arith.constant 0 : index
    %c0_8 = arith.constant 0 : index
    %13 = vector.load %arg11[%c0_7, %c0_8] : memref<16x64xbf16, #tpu.memory_space<vmem>>, vector<16x8xbf16>
    %c0_9 = arith.constant 0 : index
    %c32 = arith.constant 32 : index
    %14 = vector.load %arg11[%c0_9, %c32] : memref<16x64xbf16, #tpu.memory_space<vmem>>, vector<16x8xbf16>
    %cst_10 = arith.constant dense<0.000000e+00> : vector<8x16xf32>
    %15 = tpu.matmul %12, %13, %cst_10 {dimension_numbers = #tpu.dot_dimension_numbers<[1], [1], [0], [0], [0, 0, 1, 0], [], []>} : vector<8x8xbf16>, vector<16x8xbf16>, vector<8x16xf32> -> vector<8x16xf32>
    %cst_11 = arith.constant dense<0xFF800000> : vector<8xf32>
    %16 = vector.multi_reduction <maximumf>, %15, %cst_11 [1] : vector<8x16xf32> to vector<8xf32>
    %17 = vector.shape_cast %16 : vector<8xf32> to vector<8x1xf32>
    %18 = vector.broadcast %17 : vector<8x1xf32> to vector<8x16xf32>
    %19 = arith.subf %15, %18 : vector<8x16xf32>
    %20 = math.exp2 %19 : vector<8x16xf32>
    %cst_12 = arith.constant dense<0.000000e+00> : vector<8xf32>
    %21 = vector.multi_reduction <add>, %20, %cst_12 [1] : vector<8x16xf32> to vector<8xf32>
    %22 = vector.shape_cast %21 : vector<8xf32> to vector<8x1xf32>
    %23 = arith.truncf %20 : vector<8x16xf32> to vector<8x16xbf16>
    %cst_13 = arith.constant dense<0.000000e+00> : vector<8x8xf32>
    %24 = tpu.matmul %23, %14, %cst_13 {dimension_numbers = #tpu.dot_dimension_numbers<[1], [0], [0], [1], [0, 0, 1, 1], [], []>} : vector<8x16xbf16>, vector<16x8xbf16>, vector<8x8xf32> -> vector<8x8xf32>
    %25 = tpu.reciprocal %22 {approx = true} : vector<8x1xf32> -> vector<8x1xf32>
    %26 = vector.broadcast %25 : vector<8x1xf32> to vector<8x8xf32>
    %27 = arith.mulf %24, %26 : vector<8x8xf32>
    %c0_14 = arith.constant 0 : index
    %c0_15 = arith.constant 0 : index
    %28 = vector.load %arg12[%c0_14, %c0_15] : memref<8x32xf32, #tpu.memory_space<vmem>>, vector<8x8xf32>
    tpu.vector_store %arg12[%c0_14, %c0_15], %27 {strides = array<i32>} : memref<8x32xf32, #tpu.memory_space<vmem>>, vector<8x8xf32>,
    %29 = vector.extract_strided_slice %11 {offsets = [0, 8], sizes = [8, 8], strides = [1, 1]} : vector<8x32xbf16> to vector<8x8xbf16>
    %c0_16 = arith.constant 0 : index
    %c8 = arith.constant 8 : index
    %30 = vector.load %arg11[%c0_16, %c8] : memref<16x64xbf16, #tpu.memory_space<vmem>>, vector<16x8xbf16>
    %c0_17 = arith.constant 0 : index
    %c40 = arith.constant 40 : index
    %31 = vector.load %arg11[%c0_17, %c40] : memref<16x64xbf16, #tpu.memory_space<vmem>>, vector<16x8xbf16>
    %cst_18 = arith.constant dense<0.000000e+00> : vector<8x16xf32>
    %32 = tpu.matmul %29, %30, %cst_18 {dimension_numbers = #tpu.dot_dimension_numbers<[1], [1], [0], [0], [0, 0, 1, 0], [], []>} : vector<8x8xbf16>, vector<16x8xbf16>, vector<8x16xf32> -> vector<8x16xf32>
    %cst_19 = arith.constant dense<0xFF800000> : vector<8xf32>
    %33 = vector.multi_reduction <maximumf>, %32, %cst_19 [1] : vector<8x16xf32> to vector<8xf32>
    %34 = vector.shape_cast %33 : vector<8xf32> to vector<8x1xf32>
    %35 = vector.broadcast %34 : vector<8x1xf32> to vector<8x16xf32>
    %36 = arith.subf %32, %35 : vector<8x16xf32>
    %37 = math.exp2 %36 : vector<8x16xf32>
    %cst_20 = arith.constant dense<0.000000e+00> : vector<8xf32>
    %38 = vector.multi_reduction <add>, %37, %cst_20 [1] : vector<8x16xf32> to vector<8xf32>
    %39 = vector.shape_cast %38 : vector<8xf32> to vector<8x1xf32>
    %40 = arith.truncf %37 : vector<8x16xf32> to vector<8x16xbf16>
    %cst_21 = arith.constant dense<0.000000e+00> : vector<8x8xf32>
    %41 = tpu.matmul %40, %31, %cst_21 {dimension_numbers = #tpu.dot_dimension_numbers<[1], [0], [0], [1], [0, 0, 1, 1], [], []>} : vector<8x16xbf16>, vector<16x8xbf16>, vector<8x8xf32> -> vector<8x8xf32>
    %42 = tpu.reciprocal %39 {approx = true} : vector<8x1xf32> -> vector<8x1xf32>
    %43 = vector.broadcast %42 : vector<8x1xf32> to vector<8x8xf32>
    %44 = arith.mulf %41, %43 : vector<8x8xf32>
    %c0_22 = arith.constant 0 : index
    %c8_23 = arith.constant 8 : index
    %45 = vector.load %arg12[%c0_22, %c8_23] : memref<8x32xf32, #tpu.memory_space<vmem>>, vector<8x8xf32>
    tpu.vector_store %arg12[%c0_22, %c8_23], %44 {strides = array<i32>} : memref<8x32xf32, #tpu.memory_space<vmem>>, vector<8x8xf32>,
    %46 = vector.extract_strided_slice %11 {offsets = [0, 16], sizes = [8, 8], strides = [1, 1]} : vector<8x32xbf16> to vector<8x8xbf16>
    %c0_24 = arith.constant 0 : index
    %c16 = arith.constant 16 : index
    %47 = vector.load %arg11[%c0_24, %c16] : memref<16x64xbf16, #tpu.memory_space<vmem>>, vector<16x8xbf16>
    %c0_25 = arith.constant 0 : index
    %c48 = arith.constant 48 : index
    %48 = vector.load %arg11[%c0_25, %c48] : memref<16x64xbf16, #tpu.memory_space<vmem>>, vector<16x8xbf16>
    %cst_26 = arith.constant dense<0.000000e+00> : vector<8x16xf32>
    %49 = tpu.matmul %46, %47, %cst_26 {dimension_numbers = #tpu.dot_dimension_numbers<[1], [1], [0], [0], [0, 0, 1, 0], [], []>} : vector<8x8xbf16>, vector<16x8xbf16>, vector<8x16xf32> -> vector<8x16xf32>
    %cst_27 = arith.constant dense<0xFF800000> : vector<8xf32>
    %50 = vector.multi_reduction <maximumf>, %49, %cst_27 [1] : vector<8x16xf32> to vector<8xf32>
    %51 = vector.shape_cast %50 : vector<8xf32> to vector<8x1xf32>
    %52 = vector.broadcast %51 : vector<8x1xf32> to vector<8x16xf32>
    %53 = arith.subf %49, %52 : vector<8x16xf32>
    %54 = math.exp2 %53 : vector<8x16xf32>
    %cst_28 = arith.constant dense<0.000000e+00> : vector<8xf32>
    %55 = vector.multi_reduction <add>, %54, %cst_28 [1] : vector<8x16xf32> to vector<8xf32>
    %56 = vector.shape_cast %55 : vector<8xf32> to vector<8x1xf32>
    %57 = arith.truncf %54 : vector<8x16xf32> to vector<8x16xbf16>
    %cst_29 = arith.constant dense<0.000000e+00> : vector<8x8xf32>
    %58 = tpu.matmul %57, %48, %cst_29 {dimension_numbers = #tpu.dot_dimension_numbers<[1], [0], [0], [1], [0, 0, 1, 1], [], []>} : vector<8x16xbf16>, vector<16x8xbf16>, vector<8x8xf32> -> vector<8x8xf32>
    %59 = tpu.reciprocal %56 {approx = true} : vector<8x1xf32> -> vector<8x1xf32>
    %60 = vector.broadcast %59 : vector<8x1xf32> to vector<8x8xf32>
    %61 = arith.mulf %58, %60 : vector<8x8xf32>
    %c0_30 = arith.constant 0 : index
    %c16_31 = arith.constant 16 : index
    %62 = vector.load %arg12[%c0_30, %c16_31] : memref<8x32xf32, #tpu.memory_space<vmem>>, vector<8x8xf32>
    tpu.vector_store %arg12[%c0_30, %c16_31], %61 {strides = array<i32>} : memref<8x32xf32, #tpu.memory_space<vmem>>, vector<8x8xf32>,
    %63 = vector.extract_strided_slice %11 {offsets = [0, 24], sizes = [8, 8], strides = [1, 1]} : vector<8x32xbf16> to vector<8x8xbf16>
    %c0_32 = arith.constant 0 : index
    %c24 = arith.constant 24 : index
    %64 = vector.load %arg11[%c0_32, %c24] : memref<16x64xbf16, #tpu.memory_space<vmem>>, vector<16x8xbf16>
    %c0_33 = arith.constant 0 : index
    %c56 = arith.constant 56 : index
    %65 = vector.load %arg11[%c0_33, %c56] : memref<16x64xbf16, #tpu.memory_space<vmem>>, vector<16x8xbf16>
    %cst_34 = arith.constant dense<0.000000e+00> : vector<8x16xf32>
    %66 = tpu.matmul %63, %64, %cst_34 {dimension_numbers = #tpu.dot_dimension_numbers<[1], [1], [0], [0], [0, 0, 1, 0], [], []>} : vector<8x8xbf16>, vector<16x8xbf16>, vector<8x16xf32> -> vector<8x16xf32>
    %cst_35 = arith.constant dense<0xFF800000> : vector<8xf32>
    %67 = vector.multi_reduction <maximumf>, %66, %cst_35 [1] : vector<8x16xf32> to vector<8xf32>
    %68 = vector.shape_cast %67 : vector<8xf32> to vector<8x1xf32>
    %69 = vector.broadcast %68 : vector<8x1xf32> to vector<8x16xf32>
    %70 = arith.subf %66, %69 : vector<8x16xf32>
    %71 = math.exp2 %70 : vector<8x16xf32>
    %cst_36 = arith.constant dense<0.000000e+00> : vector<8xf32>
    %72 = vector.multi_reduction <add>, %71, %cst_36 [1] : vector<8x16xf32> to vector<8xf32>
    %73 = vector.shape_cast %72 : vector<8xf32> to vector<8x1xf32>
    %74 = arith.truncf %71 : vector<8x16xf32> to vector<8x16xbf16>
    %cst_37 = arith.constant dense<0.000000e+00> : vector<8x8xf32>
    %75 = tpu.matmul %74, %65, %cst_37 {dimension_numbers = #tpu.dot_dimension_numbers<[1], [0], [0], [1], [0, 0, 1, 1], [], []>} : vector<8x16xbf16>, vector<16x8xbf16>, vector<8x8xf32> -> vector<8x8xf32>
    %76 = tpu.reciprocal %73 {approx = true} : vector<8x1xf32> -> vector<8x1xf32>
    %77 = vector.broadcast %76 : vector<8x1xf32> to vector<8x8xf32>
    %78 = arith.mulf %75, %77 : vector<8x8xf32>
    %c0_38 = arith.constant 0 : index
    %c24_39 = arith.constant 24 : index
    %79 = vector.load %arg12[%c0_38, %c24_39] : memref<8x32xf32, #tpu.memory_space<vmem>>, vector<8x8xf32>
    tpu.vector_store %arg12[%c0_38, %c24_39], %78 {strides = array<i32>} : memref<8x32xf32, #tpu.memory_space<vmem>>, vector<8x8xf32>,
    %c0_40 = arith.constant 0 : index
    %c0_41 = arith.constant 0 : index
    %80 = vector.load %arg12[%c0_40, %c0_41] : memref<8x32xf32, #tpu.memory_space<vmem>>, vector<8x32xf32>
    %81 = arith.truncf %80 : vector<8x32xf32> to vector<8x32xbf16>
    %c0_42 = arith.constant 0 : index
    %c0_43 = arith.constant 0 : index
    %82 = vector.load %arg8[%c0_42, %c0_43] : memref<32x32xbf16, #tpu.memory_space<vmem>>, vector<32x32xbf16>
    %cst_44 = arith.constant dense<0.000000e+00> : vector<8x32xf32>
    %83 = tpu.matmul %81, %82, %cst_44 {dimension_numbers = #tpu.dot_dimension_numbers<[1], [0], [0], [1], [0, 0, 1, 1], [], []>} : vector<8x32xbf16>, vector<32x32xbf16>, vector<8x32xf32> -> vector<8x32xf32>
    %c0_45 = arith.constant 0 : index
    %c0_46 = arith.constant 0 : index
    %84 = vector.load %arg9[%c0_45, %c0_46] : memref<1x32xf32, #tpu.memory_space<vmem>>, vector<1x32xf32>
    %85 = vector.broadcast %84 : vector<1x32xf32> to vector<8x32xf32>
    %86 = arith.addf %83, %85 : vector<8x32xf32>
    %87 = arith.addf %4, %86 : vector<8x32xf32>
    %c0_47 = arith.constant 0 : index
    %c0_48 = arith.constant 0 : index
    %c0_49 = arith.constant 0 : index
    %88 = vector.load %arg10[%c0_47, %c0_48, %c0_49] : memref<1x8x32xf32, #tpu.memory_space<vmem>>, vector<1x8x32xf32>
    %89 = vector.shape_cast %88 : vector<1x8x32xf32> to vector<8x32xf32>
    %90 = vector.shape_cast %87 : vector<8x32xf32> to vector<1x8x32xf32>
    tpu.vector_store %arg10[%c0_47, %c0_48, %c0_49], %90 {strides = array<i32>} : memref<1x8x32xf32, #tpu.memory_space<vmem>>, vector<1x8x32xf32>,
    return
  }
  func.func @transform_0(%arg0: i32, %arg1: i32) -> (i32, i32, i32) {
    %c0_i32 = arith.constant 0 : i32
    %c0_i32_0 = arith.constant 0 : i32
    %c0_i32_1 = arith.constant 0 : i32
    return %arg0, %c0_i32, %c0_i32_0 : i32, i32, i32
  }
  func.func @transform_1(%arg0: i32, %arg1: i32) -> (i32, i32, i32) {
    %c0_i32 = arith.constant 0 : i32
    %c0_i32_0 = arith.constant 0 : i32
    return %arg0, %arg1, %c0_i32 : i32, i32, i32
  }
  func.func @transform_2(%arg0: i32, %arg1: i32) -> (i32, i32) {
    %c0_i32 = arith.constant 0 : i32
    %c0_i32_0 = arith.constant 0 : i32
    %c0_i32_1 = arith.constant 0 : i32
    return %c0_i32, %c0_i32_0 : i32, i32
  }
  func.func @transform_3(%arg0: i32, %arg1: i32) -> (i32, i32) {
    %c0_i32 = arith.constant 0 : i32
    %c0_i32_0 = arith.constant 0 : i32
    %c0_i32_1 = arith.constant 0 : i32
    return %c0_i32, %c0_i32_0 : i32, i32
  }
  func.func @transform_4(%arg0: i32, %arg1: i32) -> (i32, i32) {
    %c0_i32 = arith.constant 0 : i32
    %c0_i32_0 = arith.constant 0 : i32
    %c0_i32_1 = arith.constant 0 : i32
    return %c0_i32, %c0_i32_0 : i32, i32
  }
  func.func @transform_5(%arg0: i32, %arg1: i32) -> (i32, i32) {
    %c0_i32 = arith.constant 0 : i32
    %c0_i32_0 = arith.constant 0 : i32
    %c0_i32_1 = arith.constant 0 : i32
    return %c0_i32, %c0_i32_0 : i32, i32
  }
  func.func @transform_6(%arg0: i32, %arg1: i32) -> (i32, i32) {
    %c0_i32 = arith.constant 0 : i32
    %c0_i32_0 = arith.constant 0 : i32
    %c0_i32_1 = arith.constant 0 : i32
    return %c0_i32, %c0_i32_0 : i32, i32
  }
  func.func @transform_7(%arg0: i32, %arg1: i32) -> (i32, i32) {
    %c0_i32 = arith.constant 0 : i32
    %c0_i32_0 = arith.constant 0 : i32
    %c0_i32_1 = arith.constant 0 : i32
    return %c0_i32, %c0_i32_0 : i32, i32
  }
  func.func @transform_8(%arg0: i32, %arg1: i32) -> (i32, i32, i32) {
    %c0_i32 = arith.constant 0 : i32
    %c0_i32_0 = arith.constant 0 : i32
    return %arg0, %arg1, %c0_i32 : i32, i32, i32
  }
}

module attributes {stable_mosaic.version = 11 : i64} {
  func.func @_attn_block_kernel(%arg0: i32, %arg1: i32, %arg2: memref<1x16x32xbf16, #tpu.memory_space<vmem>>, %arg3: memref<1x8x32xf32, #tpu.memory_space<vmem>>, %arg4: memref<32x32xbf16, #tpu.memory_space<vmem>>, %arg5: memref<1x32xf32, #tpu.memory_space<vmem>>, %arg6: memref<32x64xbf16, #tpu.memory_space<vmem>>, %arg7: memref<1x64xf32, #tpu.memory_space<vmem>>, %arg8: memref<32x32xbf16, #tpu.memory_space<vmem>>, %arg9: memref<1x32xf32, #tpu.memory_space<vmem>>, %arg10: memref<1x8x32xf32, #tpu.memory_space<vmem>>, %arg11: memref<16x64xbf16, #tpu.memory_space<vmem>>, %arg12: memref<8x32xf32, #tpu.memory_space<vmem>>) attributes {dimension_semantics = [#tpu.dimension_semantics<parallel>, #tpu.dimension_semantics<arbitrary>], iteration_bounds = array<i64: 2, 2>, scalar_prefetch = 0 : i64, scratch_operands = 2 : i64, tpu.core_type = #tpu.core_type<tc>, window_params = [{transform_indices = @transform_0, window_bounds = array<i64: 1, 16, 32>}, {transform_indices = @transform_1, window_bounds = array<i64: 1, 8, 32>}, {pipeline_mode = #tpu.pipeline_mode<synchronous>, transform_indices = @transform_2, window_bounds = array<i64: 32, 32>}, {pipeline_mode = #tpu.pipeline_mode<synchronous>, transform_indices = @transform_3, window_bounds = array<i64: 1, 32>}, {pipeline_mode = #tpu.pipeline_mode<synchronous>, transform_indices = @transform_4, window_bounds = array<i64: 32, 64>}, {pipeline_mode = #tpu.pipeline_mode<synchronous>, transform_indices = @transform_5, window_bounds = array<i64: 1, 64>}, {pipeline_mode = #tpu.pipeline_mode<synchronous>, transform_indices = @transform_6, window_bounds = array<i64: 32, 32>}, {pipeline_mode = #tpu.pipeline_mode<synchronous>, transform_indices = @transform_7, window_bounds = array<i64: 1, 32>}, {transform_indices = @transform_8, window_bounds = array<i64: 1, 8, 32>}]} {
    %c0_i32 = arith.constant 0 : i32
    %0 = arith.cmpi eq, %arg1, %c0_i32 : i32
    %1 = arith.extui %0 : i1 to i32
    %c0_i32_0 = arith.constant 0 : i32
    %2 = arith.cmpi ne, %1, %c0_i32_0 : i32
    scf.if %2 {
      %c0_50 = arith.constant 0 : index
      %c0_51 = arith.constant 0 : index
      %c0_52 = arith.constant 0 : index
      %91 = vector.load %arg2[%c0_50, %c0_51, %c0_52] : memref<1x16x32xbf16, #tpu.memory_space<vmem>>, vector<1x16x32xbf16>
      %92 = vector.shape_cast %91 : vector<1x16x32xbf16> to vector<16x32xbf16>
      %c0_53 = arith.constant 0 : index
      %c0_54 = arith.constant 0 : index
      %93 = vector.load %arg6[%c0_53, %c0_54] : memref<32x64xbf16, #tpu.memory_space<vmem>>, vector<32x64xbf16>
      %cst_55 = arith.constant dense<0.000000e+00> : vector<16x64xf32>
      %94 = tpu.matmul %92, %93, %cst_55 {dimension_numbers = #tpu.dot_dimension_numbers<[1], [0], [0], [1], [0, 0, 1, 1], [], []>} : vector<16x32xbf16>, vector<32x64xbf16>, vector<16x64xf32> -> vector<16x64xf32>
      %c0_56 = arith.constant 0 : index
      %c0_57 = arith.constant 0 : index
      %95 = vector.load %arg7[%c0_56, %c0_57] : memref<1x64xf32, #tpu.memory_space<vmem>>, vector<1x64xf32>
      %96 = vector.broadcast %95 : vector<1x64xf32> to vector<16x64xf32>
      %97 = arith.addf %94, %96 : vector<16x64xf32>
      %98 = arith.truncf %97 : vector<16x64xf32> to vector<16x64xbf16>
      %c0_58 = arith.constant 0 : index
      %c0_59 = arith.constant 0 : index
      %99 = vector.load %arg11[%c0_58, %c0_59] : memref<16x64xbf16, #tpu.memory_space<vmem>>, vector<16x64xbf16>
      tpu.vector_store %arg11[%c0_58, %c0_59], %98 {strides = array<i32>} : memref<16x64xbf16, #tpu.memory_space<vmem>>, vector<16x64xbf16>,
    } else {
    }
    %c0 = arith.constant 0 : index
    %c0_1 = arith.constant 0 : index
    %c0_2 = arith.constant 0 : index
    %3 = vector.load %arg3[%c0, %c0_1, %c0_2] : memref<1x8x32xf32, #tpu.memory_space<vmem>>, vector<1x8x32xf32>
    %4 = vector.shape_cast %3 : vector<1x8x32xf32> to vector<8x32xf32>
    %5 = arith.truncf %4 : vector<8x32xf32> to vector<8x32xbf16>
    %c0_3 = arith.constant 0 : index
    %c0_4 = arith.constant 0 : index
    %6 = vector.load %arg4[%c0_3, %c0_4] : memref<32x32xbf16, #tpu.memory_space<vmem>>, vector<32x32xbf16>
    %cst = arith.constant dense<0.000000e+00> : vector<8x32xf32>
    %7 = tpu.matmul %5, %6, %cst {dimension_numbers = #tpu.dot_dimension_numbers<[1], [0], [0], [1], [0, 0, 1, 1], [], []>} : vector<8x32xbf16>, vector<32x32xbf16>, vector<8x32xf32> -> vector<8x32xf32>
    %c0_5 = arith.constant 0 : index
    %c0_6 = arith.constant 0 : index
    %8 = vector.load %arg5[%c0_5, %c0_6] : memref<1x32xf32, #tpu.memory_space<vmem>>, vector<1x32xf32>
    %9 = vector.broadcast %8 : vector<1x32xf32> to vector<8x32xf32>
    %10 = arith.addf %7, %9 : vector<8x32xf32>
    %11 = arith.truncf %10 : vector<8x32xf32> to vector<8x32xbf16>
    %12 = vector.extract_strided_slice %11 {offsets = [0, 0], sizes = [8, 8], strides = [1, 1]} : vector<8x32xbf16> to vector<8x8xbf16>
    %c0_7 = arith.constant 0 : index
    %c0_8 = arith.constant 0 : index
    %13 = vector.load %arg11[%c0_7, %c0_8] : memref<16x64xbf16, #tpu.memory_space<vmem>>, vector<16x8xbf16>
    %c0_9 = arith.constant 0 : index
    %c32 = arith.constant 32 : index
    %14 = vector.load %arg11[%c0_9, %c32] : memref<16x64xbf16, #tpu.memory_space<vmem>>, vector<16x8xbf16>
    %cst_10 = arith.constant dense<0.000000e+00> : vector<8x16xf32>
    %15 = tpu.matmul %12, %13, %cst_10 {dimension_numbers = #tpu.dot_dimension_numbers<[1], [1], [0], [0], [0, 0, 1, 0], [], []>} : vector<8x8xbf16>, vector<16x8xbf16>, vector<8x16xf32> -> vector<8x16xf32>
    %cst_11 = arith.constant dense<0xFF800000> : vector<8xf32>
    %16 = vector.multi_reduction <maximumf>, %15, %cst_11 [1] : vector<8x16xf32> to vector<8xf32>
    %17 = vector.shape_cast %16 : vector<8xf32> to vector<8x1xf32>
    %18 = vector.broadcast %17 : vector<8x1xf32> to vector<8x16xf32>
    %19 = arith.subf %15, %18 : vector<8x16xf32>
    %20 = math.exp2 %19 : vector<8x16xf32>
    %cst_12 = arith.constant dense<0.000000e+00> : vector<8xf32>
    %21 = vector.multi_reduction <add>, %20, %cst_12 [1] : vector<8x16xf32> to vector<8xf32>
    %22 = vector.shape_cast %21 : vector<8xf32> to vector<8x1xf32>
    %23 = arith.truncf %20 : vector<8x16xf32> to vector<8x16xbf16>
    %cst_13 = arith.constant dense<0.000000e+00> : vector<8x8xf32>
    %24 = tpu.matmul %23, %14, %cst_13 {dimension_numbers = #tpu.dot_dimension_numbers<[1], [0], [0], [1], [0, 0, 1, 1], [], []>} : vector<8x16xbf16>, vector<16x8xbf16>, vector<8x8xf32> -> vector<8x8xf32>
    %25 = tpu.reciprocal %22 {approx = true} : vector<8x1xf32> -> vector<8x1xf32>
    %26 = vector.broadcast %25 : vector<8x1xf32> to vector<8x8xf32>
    %27 = arith.mulf %24, %26 : vector<8x8xf32>
    %c0_14 = arith.constant 0 : index
    %c0_15 = arith.constant 0 : index
    %28 = vector.load %arg12[%c0_14, %c0_15] : memref<8x32xf32, #tpu.memory_space<vmem>>, vector<8x8xf32>
    tpu.vector_store %arg12[%c0_14, %c0_15], %27 {strides = array<i32>} : memref<8x32xf32, #tpu.memory_space<vmem>>, vector<8x8xf32>,
    %29 = vector.extract_strided_slice %11 {offsets = [0, 8], sizes = [8, 8], strides = [1, 1]} : vector<8x32xbf16> to vector<8x8xbf16>
    %c0_16 = arith.constant 0 : index
    %c8 = arith.constant 8 : index
    %30 = vector.load %arg11[%c0_16, %c8] : memref<16x64xbf16, #tpu.memory_space<vmem>>, vector<16x8xbf16>
    %c0_17 = arith.constant 0 : index
    %c40 = arith.constant 40 : index
    %31 = vector.load %arg11[%c0_17, %c40] : memref<16x64xbf16, #tpu.memory_space<vmem>>, vector<16x8xbf16>
    %cst_18 = arith.constant dense<0.000000e+00> : vector<8x16xf32>
    %32 = tpu.matmul %29, %30, %cst_18 {dimension_numbers = #tpu.dot_dimension_numbers<[1], [1], [0], [0], [0, 0, 1, 0], [], []>} : vector<8x8xbf16>, vector<16x8xbf16>, vector<8x16xf32> -> vector<8x16xf32>
    %cst_19 = arith.constant dense<0xFF800000> : vector<8xf32>
    %33 = vector.multi_reduction <maximumf>, %32, %cst_19 [1] : vector<8x16xf32> to vector<8xf32>
    %34 = vector.shape_cast %33 : vector<8xf32> to vector<8x1xf32>
    %35 = vector.broadcast %34 : vector<8x1xf32> to vector<8x16xf32>
    %36 = arith.subf %32, %35 : vector<8x16xf32>
    %37 = math.exp2 %36 : vector<8x16xf32>
    %cst_20 = arith.constant dense<0.000000e+00> : vector<8xf32>
    %38 = vector.multi_reduction <add>, %37, %cst_20 [1] : vector<8x16xf32> to vector<8xf32>
    %39 = vector.shape_cast %38 : vector<8xf32> to vector<8x1xf32>
    %40 = arith.truncf %37 : vector<8x16xf32> to vector<8x16xbf16>
    %cst_21 = arith.constant dense<0.000000e+00> : vector<8x8xf32>
    %41 = tpu.matmul %40, %31, %cst_21 {dimension_numbers = #tpu.dot_dimension_numbers<[1], [0], [0], [1], [0, 0, 1, 1], [], []>} : vector<8x16xbf16>, vector<16x8xbf16>, vector<8x8xf32> -> vector<8x8xf32>
    %42 = tpu.reciprocal %39 {approx = true} : vector<8x1xf32> -> vector<8x1xf32>
    %43 = vector.broadcast %42 : vector<8x1xf32> to vector<8x8xf32>
    %44 = arith.mulf %41, %43 : vector<8x8xf32>
    %c0_22 = arith.constant 0 : index
    %c8_23 = arith.constant 8 : index
    %45 = vector.load %arg12[%c0_22, %c8_23] : memref<8x32xf32, #tpu.memory_space<vmem>>, vector<8x8xf32>
    tpu.vector_store %arg12[%c0_22, %c8_23], %44 {strides = array<i32>} : memref<8x32xf32, #tpu.memory_space<vmem>>, vector<8x8xf32>,
    %46 = vector.extract_strided_slice %11 {offsets = [0, 16], sizes = [8, 8], strides = [1, 1]} : vector<8x32xbf16> to vector<8x8xbf16>
    %c0_24 = arith.constant 0 : index
    %c16 = arith.constant 16 : index
    %47 = vector.load %arg11[%c0_24, %c16] : memref<16x64xbf16, #tpu.memory_space<vmem>>, vector<16x8xbf16>
    %c0_25 = arith.constant 0 : index
    %c48 = arith.constant 48 : index
    %48 = vector.load %arg11[%c0_25, %c48] : memref<16x64xbf16, #tpu.memory_space<vmem>>, vector<16x8xbf16>
    %cst_26 = arith.constant dense<0.000000e+00> : vector<8x16xf32>
    %49 = tpu.matmul %46, %47, %cst_26 {dimension_numbers = #tpu.dot_dimension_numbers<[1], [1], [0], [0], [0, 0, 1, 0], [], []>} : vector<8x8xbf16>, vector<16x8xbf16>, vector<8x16xf32> -> vector<8x16xf32>
    %cst_27 = arith.constant dense<0xFF800000> : vector<8xf32>
    %50 = vector.multi_reduction <maximumf>, %49, %cst_27 [1] : vector<8x16xf32> to vector<8xf32>
    %51 = vector.shape_cast %50 : vector<8xf32> to vector<8x1xf32>
    %52 = vector.broadcast %51 : vector<8x1xf32> to vector<8x16xf32>
    %53 = arith.subf %49, %52 : vector<8x16xf32>
    %54 = math.exp2 %53 : vector<8x16xf32>
    %cst_28 = arith.constant dense<0.000000e+00> : vector<8xf32>
    %55 = vector.multi_reduction <add>, %54, %cst_28 [1] : vector<8x16xf32> to vector<8xf32>
    %56 = vector.shape_cast %55 : vector<8xf32> to vector<8x1xf32>
    %57 = arith.truncf %54 : vector<8x16xf32> to vector<8x16xbf16>
    %cst_29 = arith.constant dense<0.000000e+00> : vector<8x8xf32>
    %58 = tpu.matmul %57, %48, %cst_29 {dimension_numbers = #tpu.dot_dimension_numbers<[1], [0], [0], [1], [0, 0, 1, 1], [], []>} : vector<8x16xbf16>, vector<16x8xbf16>, vector<8x8xf32> -> vector<8x8xf32>
    %59 = tpu.reciprocal %56 {approx = true} : vector<8x1xf32> -> vector<8x1xf32>
    %60 = vector.broadcast %59 : vector<8x1xf32> to vector<8x8xf32>
    %61 = arith.mulf %58, %60 : vector<8x8xf32>
    %c0_30 = arith.constant 0 : index
    %c16_31 = arith.constant 16 : index
    %62 = vector.load %arg12[%c0_30, %c16_31] : memref<8x32xf32, #tpu.memory_space<vmem>>, vector<8x8xf32>
    tpu.vector_store %arg12[%c0_30, %c16_31], %61 {strides = array<i32>} : memref<8x32xf32, #tpu.memory_space<vmem>>, vector<8x8xf32>,
    %63 = vector.extract_strided_slice %11 {offsets = [0, 24], sizes = [8, 8], strides = [1, 1]} : vector<8x32xbf16> to vector<8x8xbf16>
    %c0_32 = arith.constant 0 : index
    %c24 = arith.constant 24 : index
    %64 = vector.load %arg11[%c0_32, %c24] : memref<16x64xbf16, #tpu.memory_space<vmem>>, vector<16x8xbf16>
    %c0_33 = arith.constant 0 : index
    %c56 = arith.constant 56 : index
    %65 = vector.load %arg11[%c0_33, %c56] : memref<16x64xbf16, #tpu.memory_space<vmem>>, vector<16x8xbf16>
    %cst_34 = arith.constant dense<0.000000e+00> : vector<8x16xf32>
    %66 = tpu.matmul %63, %64, %cst_34 {dimension_numbers = #tpu.dot_dimension_numbers<[1], [1], [0], [0], [0, 0, 1, 0], [], []>} : vector<8x8xbf16>, vector<16x8xbf16>, vector<8x16xf32> -> vector<8x16xf32>
    %cst_35 = arith.constant dense<0xFF800000> : vector<8xf32>
    %67 = vector.multi_reduction <maximumf>, %66, %cst_35 [1] : vector<8x16xf32> to vector<8xf32>
    %68 = vector.shape_cast %67 : vector<8xf32> to vector<8x1xf32>
    %69 = vector.broadcast %68 : vector<8x1xf32> to vector<8x16xf32>
    %70 = arith.subf %66, %69 : vector<8x16xf32>
    %71 = math.exp2 %70 : vector<8x16xf32>
    %cst_36 = arith.constant dense<0.000000e+00> : vector<8xf32>
    %72 = vector.multi_reduction <add>, %71, %cst_36 [1] : vector<8x16xf32> to vector<8xf32>
    %73 = vector.shape_cast %72 : vector<8xf32> to vector<8x1xf32>
    %74 = arith.truncf %71 : vector<8x16xf32> to vector<8x16xbf16>
    %cst_37 = arith.constant dense<0.000000e+00> : vector<8x8xf32>
    %75 = tpu.matmul %74, %65, %cst_37 {dimension_numbers = #tpu.dot_dimension_numbers<[1], [0], [0], [1], [0, 0, 1, 1], [], []>} : vector<8x16xbf16>, vector<16x8xbf16>, vector<8x8xf32> -> vector<8x8xf32>
    %76 = tpu.reciprocal %73 {approx = true} : vector<8x1xf32> -> vector<8x1xf32>
    %77 = vector.broadcast %76 : vector<8x1xf32> to vector<8x8xf32>
    %78 = arith.mulf %75, %77 : vector<8x8xf32>
    %c0_38 = arith.constant 0 : index
    %c24_39 = arith.constant 24 : index
    %79 = vector.load %arg12[%c0_38, %c24_39] : memref<8x32xf32, #tpu.memory_space<vmem>>, vector<8x8xf32>
    tpu.vector_store %arg12[%c0_38, %c24_39], %78 {strides = array<i32>} : memref<8x32xf32, #tpu.memory_space<vmem>>, vector<8x8xf32>,
    %c0_40 = arith.constant 0 : index
    %c0_41 = arith.constant 0 : index
    %80 = vector.load %arg12[%c0_40, %c0_41] : memref<8x32xf32, #tpu.memory_space<vmem>>, vector<8x32xf32>
    %81 = arith.truncf %80 : vector<8x32xf32> to vector<8x32xbf16>
    %c0_42 = arith.constant 0 : index
    %c0_43 = arith.constant 0 : index
    %82 = vector.load %arg8[%c0_42, %c0_43] : memref<32x32xbf16, #tpu.memory_space<vmem>>, vector<32x32xbf16>
    %cst_44 = arith.constant dense<0.000000e+00> : vector<8x32xf32>
    %83 = tpu.matmul %81, %82, %cst_44 {dimension_numbers = #tpu.dot_dimension_numbers<[1], [0], [0], [1], [0, 0, 1, 1], [], []>} : vector<8x32xbf16>, vector<32x32xbf16>, vector<8x32xf32> -> vector<8x32xf32>
    %c0_45 = arith.constant 0 : index
    %c0_46 = arith.constant 0 : index
    %84 = vector.load %arg9[%c0_45, %c0_46] : memref<1x32xf32, #tpu.memory_space<vmem>>, vector<1x32xf32>
    %85 = vector.broadcast %84 : vector<1x32xf32> to vector<8x32xf32>
    %86 = arith.addf %83, %85 : vector<8x32xf32>
    %87 = arith.addf %4, %86 : vector<8x32xf32>
    %c0_47 = arith.constant 0 : index
    %c0_48 = arith.constant 0 : index
    %c0_49 = arith.constant 0 : index
    %88 = vector.load %arg10[%c0_47, %c0_48, %c0_49] : memref<1x8x32xf32, #tpu.memory_space<vmem>>, vector<1x8x32xf32>
    %89 = vector.shape_cast %88 : vector<1x8x32xf32> to vector<8x32xf32>
    %90 = vector.shape_cast %87 : vector<8x32xf32> to vector<1x8x32xf32>
    tpu.vector_store %arg10[%c0_47, %c0_48, %c0_49], %90 {strides = array<i32>} : memref<1x8x32xf32, #tpu.memory_space<vmem>>, vector<1x8x32xf32>,
    return
  }
  func.func @transform_0(%arg0: i32, %arg1: i32) -> (i32, i32, i32) {
    %c0_i32 = arith.constant 0 : i32
    %c0_i32_0 = arith.constant 0 : i32
    %c0_i32_1 = arith.constant 0 : i32
    return %arg0, %c0_i32, %c0_i32_0 : i32, i32, i32
  }
  func.func @transform_1(%arg0: i32, %arg1: i32) -> (i32, i32, i32) {
    %c0_i32 = arith.constant 0 : i32
    %c0_i32_0 = arith.constant 0 : i32
    return %arg0, %arg1, %c0_i32 : i32, i32, i32
  }
  func.func @transform_2(%arg0: i32, %arg1: i32) -> (i32, i32) {
    %c0_i32 = arith.constant 0 : i32
    %c0_i32_0 = arith.constant 0 : i32
    %c0_i32_1 = arith.constant 0 : i32
    return %c0_i32, %c0_i32_0 : i32, i32
  }
  func.func @transform_3(%arg0: i32, %arg1: i32) -> (i32, i32) {
    %c0_i32 = arith.constant 0 : i32
    %c0_i32_0 = arith.constant 0 : i32
    %c0_i32_1 = arith.constant 0 : i32
    return %c0_i32, %c0_i32_0 : i32, i32
  }
  func.func @transform_4(%arg0: i32, %arg1: i32) -> (i32, i32) {
    %c0_i32 = arith.constant 0 : i32
    %c0_i32_0 = arith.constant 0 : i32
    %c0_i32_1 = arith.constant 0 : i32
    return %c0_i32, %c0_i32_0 : i32, i32
  }
  func.func @transform_5(%arg0: i32, %arg1: i32) -> (i32, i32) {
    %c0_i32 = arith.constant 0 : i32
    %c0_i32_0 = arith.constant 0 : i32
    %c0_i32_1 = arith.constant 0 : i32
    return %c0_i32, %c0_i32_0 : i32, i32
  }
  func.func @transform_6(%arg0: i32, %arg1: i32) -> (i32, i32) {
    %c0_i32 = arith.constant 0 : i32
    %c0_i32_0 = arith.constant 0 : i32
    %c0_i32_1 = arith.constant 0 : i32
    return %c0_i32, %c0_i32_0 : i32, i32
  }
  func.func @transform_7(%arg0: i32, %arg1: i32) -> (i32, i32) {
    %c0_i32 = arith.constant 0 : i32
    %c0_i32_0 = arith.constant 0 : i32
    %c0_i32_1 = arith.constant 0 : i32
    return %c0_i32, %c0_i32_0 : i32, i32
  }
  func.func @transform_8(%arg0: i32, %arg1: i32) -> (i32, i32, i32) {
    %c0_i32 = arith.constant 0 : i32
    %c0_i32_0 = arith.constant 0 : i32
    return %arg0, %arg1, %c0_i32 : i32, i32, i32
  }
}

</mosaic_0001>

<llo_original>
// kernel: tpu_custom_call.1
$region0: #{tpu_custom_call.1}
  #allocation0 [shape = 'u32[]', space=smem, size = 0x4, offset = 0x4, fixed_abs, tag = 'smem constant byte address 0x4 - core index']
  #allocation1 [shape = 'u32[144,128]{1,0:T(1,128)}', space=vmem, size = 0x12000, scoped, tag = 'internal scratch']
  #allocation2 [shape = 'bf16[16,64]{1,0:T(8,128)(2,1)}', space=vmem, size = 0x1000, scoped, tag = 'scratch operand']
  #allocation3 [shape = 'f32[8,32]{1,0:T(8,128)}', space=vmem, size = 0x1000, scoped, tag = 'scratch operand']
  %s0 = inlined_call_operand.hbm [shape: bf16[2,16,32], index: 0, kind: input, shape index: {}]
  %s1 = inlined_call_operand.hbm [shape: f32[2,16,32], index: 1, kind: input, shape index: {}]
  %s2 = inlined_call_operand.hbm [shape: bf16[32,32], index: 2, kind: input, shape index: {}]
  %s3 = inlined_call_operand.vmem [shape: f32[1,32], index: 3, kind: input, shape index: {}]
  %s4 = inlined_call_operand.hbm [shape: bf16[32,64], index: 4, kind: input, shape index: {}]
  %s5 = inlined_call_operand.vmem [shape: f32[1,64], index: 5, kind: input, shape index: {}]
  %s6 = inlined_call_operand.hbm [shape: bf16[32,32], index: 6, kind: input, shape index: {}]
  %s7 = inlined_call_operand.vmem [shape: f32[1,32], index: 7, kind: input, shape index: {}]
  %s8 = inlined_call_operand.hbm [shape: f32[2,16,32], index: 8, kind: output, shape index: {}]
  %s9 = sld [smem:[#allocation0]]
  $region89: #{tpu_custom_call.1} parent=0
    _
  %s11 = ssub.s32 1, %s9
  %s12 = scalar_select 0, %s11, %s9
  $region1: #{tpu_custom_call.1} parent=0
    #allocation4 [shape = 'u8[8192]{0}', space=vmem, size = 0x2000, scoped, tag = 'input window, operand 0']
    #allocation5 [shape = 's32[2]{0}', space=sflag, size = 0x8, scoped, tag = 'scoped memory for tpu_custom_call.1']
    #allocation6 [shape = 's32[2]{0}', space=sflag, size = 0x8, scoped, tag = 'scoped memory for tpu_custom_call.1']
    #allocation7 [shape = 'u8[8192]{0}', space=vmem, size = 0x2000, scoped, tag = 'input window, operand 1']
    #allocation8 [shape = 's32[2]{0}', space=sflag, size = 0x8, scoped, tag = 'scoped memory for tpu_custom_call.1']
    #allocation9 [shape = 'u8[8192]{0}', space=vmem, size = 0x2000, scoped, tag = 'input window, operand 2, single buffered']
    #allocation10 [shape = 'u8[8192]{0}', space=vmem, size = 0x2000, scoped, tag = 'input window, operand 4, single buffered']
    #allocation11 [shape = 's32[1]{0}', space=sflag, size = 0x4, scoped, tag = 'scoped memory for tpu_custom_call.1']
    #allocation12 [shape = 'u8[8192]{0}', space=vmem, size = 0x2000, scoped, tag = 'input window, operand 6, single buffered']
    #allocation13 [shape = 'u8[8192]{0}', space=vmem, size = 0x2000, scoped, tag = 'output window, operand 0']
    %13 = vsyncpa [#allocation5], 0
    %s14 = scalar_lea.sflag [#allocation5], 1
    %15 = vsyncpa %s14, 0
    %16 = vsyncpa [#allocation8], 0
    %s17 = scalar_lea.sflag [#allocation8], 1
    %18 = vsyncpa %s17, 0
    %19 = vsyncpa [#allocation11], 0
    %20 = vsyncpa [#allocation6], 0
    %s21 = scalar_lea.sflag [#allocation6], 1
    %22 = vsyncpa %s21, 0
    loop: start=0, step=1, limit=6
    $region2: #{tpu_custom_call.1} parent=1 // loop_pre_header
      _
    $region3: #{tpu_custom_call.1} parent=1 // loop_header
      %s24 = sphi 0, %s28
      %p25 = scmp.ge.s32.totalorder %s24, 6
      %s31 = sphi 0, %s43
      %s32 = sphi 0, %s39
      %s33 = sphi 0, %s31
      %s34 = sphi 0, %s32
      %s35 = sphi 0, %s33
      %s36 = sphi 0, %s34
      %s46 = sphi 0, %s48
      %s49 = sphi 0, %s46
      %s50 = sphi 0, %s49
      %s66 = sphi 0, %s50
      %s74 = sphi 0, %s76
      %s77 = sphi 0, %s74
      %s78 = sphi 0, %s77
      %s94 = sphi 0, %s78
      %s98 = sphi 0, %s98
      %s100 = sphi 0, %s98
      %s101 = sphi 0, %s100
      %s115 = sphi 0, %s101
      %s119 = sphi 0, %s119
      %s121 = sphi 0, %s119
      %s122 = sphi 0, %s121
      %s136 = sphi 0, %s122
      %s140 = sphi 0, %s140
      %s142 = sphi 0, %s140
      %s143 = sphi 0, %s142
      %s157 = sphi 0, %s143
      %s161 = sphi 0, %s161
      %s163 = sphi 0, %s161
      %s164 = sphi 0, %s163
      %s178 = sphi 0, %s164
      %s182 = sphi 0, %s182
      %s184 = sphi 0, %s182
      %s185 = sphi 0, %s184
      %s199 = sphi 0, %s185
      %s203 = sphi 0, %s203
      %s205 = sphi 0, %s203
      %s206 = sphi 0, %s205
      %s220 = sphi 0, %s206
      %s228 = sphi 0, %s230
      %s231 = sphi 0, %s228
      %s232 = sphi 0, %s231
      %s248 = sphi 0, %s232
    $region4: #{tpu_custom_call.1} parent=1 // loop_header_branch
      %27 = sbr.rel (%p25) target = $region8
    $region5: #{tpu_custom_call.1} parent=1 // loop_body
      %s29 = ssub.s32 %s24, 1
      %s30 = ssub.s32 %s24, 2
      %s37 = sadd.s32 1, %s32
      %p38 = scmp.ge.s32.totalorder %s37, 2
      %s39 = scalar_select %p38, 0, %s37
      %s40 = sadd.s32 1, %s31
      %s41 = scalar_select %p38, %s40, %s31
      %p42 = scmp.ge.s32.totalorder %s41, 2
      %s43 = scalar_select %p42, 0, %s41
      %s44 = ssub.s32 %s31, %s43
      %p45 = scmp.eq.s32.totalorder %s44, 0
      %s47 = sadd.s32 %s46, 1
      %s48 = scalar_select %p45, %s46, %s47
      %p51 = pneg %p45
      %p52 = scmp.eq.s32.totalorder %s24, 3
      %p53 = por %p51, %p52
      %p54 = scmp.ne.s32.totalorder %s46, %s49
      %p55 = scmp.eq.s32.totalorder %s24, 0
      %p56 = por %p54, %p55
      %p57 = scmp.ne.s32.totalorder %s46, %s49
      %p58 = scmp.eq.s32.totalorder %s29, 3
      %p59 = por %p57, %p58
      %p60 = scmp.ne.s32.totalorder %s49, %s50
      %p61 = scmp.eq.s32.totalorder %s29, 0
      %p62 = por %p60, %p61
      %p63 = scmp.ne.s32.totalorder %s49, %s50
      %p64 = scmp.eq.s32.totalorder %s30, 3
      %p65 = por %p63, %p64
      %p67 = scmp.ne.s32.totalorder %s50, %s66
      %p68 = scmp.eq.s32.totalorder %s30, 0
      %p69 = por %p67, %p68
      %s70 = ssub.s32 %s31, %s43
      %s71 = ssub.s32 %s32, %s39
      %s72 = sor.u32 %s70, %s71
      %p73 = scmp.eq.s32.totalorder %s72, 0
      %s75 = sadd.s32 %s74, 1
      %s76 = scalar_select %p73, %s74, %s75
      %p79 = pneg %p73
      %p80 = scmp.eq.s32.totalorder %s24, 3
      %p81 = por %p79, %p80
      %p82 = scmp.ne.s32.totalorder %s74, %s77
      %p83 = scmp.eq.s32.totalorder %s24, 0
      %p84 = por %p82, %p83
      %p85 = scmp.ne.s32.totalorder %s74, %s77
      %p86 = scmp.eq.s32.totalorder %s29, 3
      %p87 = por %p85, %p86
      %p88 = scmp.ne.s32.totalorder %s77, %s78
      %p89 = scmp.eq.s32.totalorder %s29, 0
      %p90 = por %p88, %p89
      %p91 = scmp.ne.s32.totalorder %s77, %s78
      %p92 = scmp.eq.s32.totalorder %s30, 3
      %p93 = por %p91, %p92
      %p95 = scmp.ne.s32.totalorder %s78, %s94
      %p96 = scmp.eq.s32.totalorder %s30, 0
      %p97 = por %p95, %p96
      %s99 = sadd.s32 %s98, 1
      %p102 = scmp.eq.s32.totalorder %s24, 3
      %p103 = scmp.ne.s32.totalorder %s98, %s100
      %p104 = scmp.eq.s32.totalorder %s24, 0
      %p105 = por %p103, %p104
      %p106 = scmp.ne.s32.totalorder %s98, %s100
      %p107 = scmp.eq.s32.totalorder %s29, 3
      %p108 = por %p106, %p107
      %p109 = scmp.ne.s32.totalorder %s100, %s101
      %p110 = scmp.eq.s32.totalorder %s29, 0
      %p111 = por %p109, %p110
      %p112 = scmp.ne.s32.totalorder %s100, %s101
      %p113 = scmp.eq.s32.totalorder %s30, 3
      %p114 = por %p112, %p113
      %p116 = scmp.ne.s32.totalorder %s101, %s115
      %p117 = scmp.eq.s32.totalorder %s30, 0
      %p118 = por %p116, %p117
      %s120 = sadd.s32 %s119, 1
      %p123 = scmp.eq.s32.totalorder %s24, 3
      %p124 = scmp.ne.s32.totalorder %s119, %s121
      %p125 = scmp.eq.s32.totalorder %s24, 0
      %p126 = por %p124, %p125
      %p127 = scmp.ne.s32.totalorder %s119, %s121
      %p128 = scmp.eq.s32.totalorder %s29, 3
      %p129 = por %p127, %p128
      %p130 = scmp.ne.s32.totalorder %s121, %s122
      %p131 = scmp.eq.s32.totalorder %s29, 0
      %p132 = por %p130, %p131
      %p133 = scmp.ne.s32.totalorder %s121, %s122
      %p134 = scmp.eq.s32.totalorder %s30, 3
      %p135 = por %p133, %p134
      %p137 = scmp.ne.s32.totalorder %s122, %s136
      %p138 = scmp.eq.s32.totalorder %s30, 0
      %p139 = por %p137, %p138
      %s141 = sadd.s32 %s140, 1
      %p144 = scmp.eq.s32.totalorder %s24, 3
      %p145 = scmp.ne.s32.totalorder %s140, %s142
      %p146 = scmp.eq.s32.totalorder %s24, 0
      %p147 = por %p145, %p146
      %p148 = scmp.ne.s32.totalorder %s140, %s142
      %p149 = scmp.eq.s32.totalorder %s29, 3
      %p150 = por %p148, %p149
      %p151 = scmp.ne.s32.totalorder %s142, %s143
      %p152 = scmp.eq.s32.totalorder %s29, 0
      %p153 = por %p151, %p152
      %p154 = scmp.ne.s32.totalorder %s142, %s143
      %p155 = scmp.eq.s32.totalorder %s30, 3
      %p156 = por %p154, %p155
      %p158 = scmp.ne.s32.totalorder %s143, %s157
      %p159 = scmp.eq.s32.totalorder %s30, 0
      %p160 = por %p158, %p159
      %s162 = sadd.s32 %s161, 1
      %p165 = scmp.eq.s32.totalorder %s24, 3
      %p166 = scmp.ne.s32.totalorder %s161, %s163
      %p167 = scmp.eq.s32.totalorder %s24, 0
      %p168 = por %p166, %p167
      %p169 = scmp.ne.s32.totalorder %s161, %s163
      %p170 = scmp.eq.s32.totalorder %s29, 3
      %p171 = por %p169, %p170
      %p172 = scmp.ne.s32.totalorder %s163, %s164
      %p173 = scmp.eq.s32.totalorder %s29, 0
      %p174 = por %p172, %p173
      %p175 = scmp.ne.s32.totalorder %s163, %s164
      %p176 = scmp.eq.s32.totalorder %s30, 3
      %p177 = por %p175, %p176
      %p179 = scmp.ne.s32.totalorder %s164, %s178
      %p180 = scmp.eq.s32.totalorder %s30, 0
      %p181 = por %p179, %p180
      %s183 = sadd.s32 %s182, 1
      %p186 = scmp.eq.s32.totalorder %s24, 3
      %p187 = scmp.ne.s32.totalorder %s182, %s184
      %p188 = scmp.eq.s32.totalorder %s24, 0
      %p189 = por %p187, %p188
      %p190 = scmp.ne.s32.totalorder %s182, %s184
      %p191 = scmp.eq.s32.totalorder %s29, 3
      %p192 = por %p190, %p191
      %p193 = scmp.ne.s32.totalorder %s184, %s185
      %p194 = scmp.eq.s32.totalorder %s29, 0
      %p195 = por %p193, %p194
      %p196 = scmp.ne.s32.totalorder %s184, %s185
      %p197 = scmp.eq.s32.totalorder %s30, 3
      %p198 = por %p196, %p197
      %p200 = scmp.ne.s32.totalorder %s185, %s199
      %p201 = scmp.eq.s32.totalorder %s30, 0
      %p202 = por %p200, %p201
      %s204 = sadd.s32 %s203, 1
      %p207 = scmp.eq.s32.totalorder %s24, 3
      %p208 = scmp.ne.s32.totalorder %s203, %s205
      %p209 = scmp.eq.s32.totalorder %s24, 0
      %p210 = por %p208, %p209
      %p211 = scmp.ne.s32.totalorder %s203, %s205
      %p212 = scmp.eq.s32.totalorder %s29, 3
      %p213 = por %p211, %p212
      %p214 = scmp.ne.s32.totalorder %s205, %s206
      %p215 = scmp.eq.s32.totalorder %s29, 0
      %p216 = por %p214, %p215
      %p217 = scmp.ne.s32.totalorder %s205, %s206
      %p218 = scmp.eq.s32.totalorder %s30, 3
      %p219 = por %p217, %p218
      %p221 = scmp.ne.s32.totalorder %s206, %s220
      %p222 = scmp.eq.s32.totalorder %s30, 0
      %p223 = por %p221, %p222
      %s224 = ssub.s32 %s31, %s43
      %s225 = ssub.s32 %s32, %s39
      %s226 = sor.u32 %s224, %s225
      %p227 = scmp.eq.s32.totalorder %s226, 0
      %s229 = sadd.s32 %s228, 1
      %s230 = scalar_select %p227, %s228, %s229
      %p233 = pneg %p227
      %p234 = scmp.eq.s32.totalorder %s24, 3
      %p235 = por %p233, %p234
      %p236 = scmp.ne.s32.totalorder %s228, %s231
      %p237 = scmp.eq.s32.totalorder %s24, 0
      %p238 = por %p236, %p237
      %p239 = scmp.ne.s32.totalorder %s228, %s231
      %p240 = scmp.eq.s32.totalorder %s29, 3
      %p241 = por %p239, %p240
      %p242 = scmp.ne.s32.totalorder %s231, %s232
      %p243 = scmp.eq.s32.totalorder %s29, 0
      %p244 = por %p242, %p243
      %p245 = scmp.ne.s32.totalorder %s231, %s232
      %p246 = scmp.eq.s32.totalorder %s30, 3
      %p247 = por %p245, %p246
      %p249 = scmp.ne.s32.totalorder %s232, %s248
      %p250 = scmp.eq.s32.totalorder %s30, 0
      %p251 = por %p249, %p250
      %p252 = scmp.le.s32.totalorder 1, %s24
      %p253 = scmp.lt.s32.totalorder %s24, 5
      %p254 = pnand %p252, %p253
      %p255 = pneg %p254
      // Predicated region
      $region9: #{tpu_custom_call.1} parent=5 // pred_check
        _
      $region10: #{tpu_custom_call.1} parent=5 // pred_check_branch
        %257 = sbr.rel (%p254) target = $region12
      $region11: #{tpu_custom_call.1} parent=5 // pred_region
        %s258 = ssub.s32 %s24, 1
        // Predicated region
        $region13: #{tpu_custom_call.1} parent=11 // pred_check
          %p259 = pneg %p111
        $region14: #{tpu_custom_call.1} parent=11 // pred_check_branch
          %261 = sbr.rel (%p259) target = $region16
        $region15: #{tpu_custom_call.1} parent=11 // pred_region
          %s263 = ssub.s32 256, 256
          %264 = vsyncadd [#allocation8], %s263
          %s265 = sshll.u32 [#allocation9], 4
          %s266 = int_to_ptr.vmem [resolvable:$true] %s265
          %271 = dma.hbm_to_vmem [thread:$0]  %s2, 256, %s266, [#allocation8], 64, 64, 4
        $region16: #{tpu_custom_call.1} parent=11 // pred_fallthru
          _
        // Predicated region
        $region17: #{tpu_custom_call.1} parent=11 // pred_check
          %p272 = pneg %p132
        $region18: #{tpu_custom_call.1} parent=11 // pred_check_branch
          %274 = sbr.rel (%p272) target = $region20
        $region19: #{tpu_custom_call.1} parent=11 // pred_region
          _
        $region20: #{tpu_custom_call.1} parent=11 // pred_fallthru
          _
        // Predicated region
        $region21: #{tpu_custom_call.1} parent=11 // pred_check
          %p275 = pneg %p153
        $region22: #{tpu_custom_call.1} parent=11 // pred_check_branch
          %277 = sbr.rel (%p275) target = $region24
        $region23: #{tpu_custom_call.1} parent=11 // pred_region
          %s279 = ssub.s32 256, 256
          %280 = vsyncadd [#allocation11], %s279
          %s281 = sshll.u32 [#allocation10], 4
          %s282 = int_to_ptr.vmem [resolvable:$true] %s281
          %287 = dma.hbm_to_vmem [thread:$0]  %s4, 256, %s282, [#allocation11], 64, 64, 4
        $region24: #{tpu_custom_call.1} parent=11 // pred_fallthru
          _
        // Predicated region
        $region25: #{tpu_custom_call.1} parent=11 // pred_check
          %p288 = pneg %p174
        $region26: #{tpu_custom_call.1} parent=11 // pred_check_branch
          %290 = sbr.rel (%p288) target = $region28
        $region27: #{tpu_custom_call.1} parent=11 // pred_region
          _
        $region28: #{tpu_custom_call.1} parent=11 // pred_fallthru
          _
        // Predicated region
        $region29: #{tpu_custom_call.1} parent=11 // pred_check
          %p291 = pneg %p195
        $region30: #{tpu_custom_call.1} parent=11 // pred_check_branch
          %293 = sbr.rel (%p291) target = $region32
        $region31: #{tpu_custom_call.1} parent=11 // pred_region
          %s295 = ssub.s32 256, 256
          %296 = vsyncadd [#allocation11], %s295
          %s297 = sshll.u32 [#allocation12], 4
          %s298 = int_to_ptr.vmem [resolvable:$true] %s297
          %303 = dma.hbm_to_vmem [thread:$0]  %s6, 256, %s298, [#allocation11], 64, 64, 4
        $region32: #{tpu_custom_call.1} parent=11 // pred_fallthru
          _
        // Predicated region
        $region33: #{tpu_custom_call.1} parent=11 // pred_check
          %p304 = pneg %p216
        $region34: #{tpu_custom_call.1} parent=11 // pred_check_branch
          %306 = sbr.rel (%p304) target = $region36
        $region35: #{tpu_custom_call.1} parent=11 // pred_region
          _
        $region36: #{tpu_custom_call.1} parent=11 // pred_fallthru
          _
      $region12: #{tpu_custom_call.1} parent=5 // pred_fallthru
        _
      %p307 = scmp.lt.s32.totalorder %s24, 4
      // Predicated region
      $region37: #{tpu_custom_call.1} parent=5 // pred_check
        %p308 = pneg %p307
      $region38: #{tpu_custom_call.1} parent=5 // pred_check_branch
        %310 = sbr.rel (%p308) target = $region40
      $region39: #{tpu_custom_call.1} parent=5 // pred_region
        // Predicated region
        $region41: #{tpu_custom_call.1} parent=39 // pred_check
          %p311 = pneg %p56
        $region42: #{tpu_custom_call.1} parent=39 // pred_check_branch
          %313 = sbr.rel (%p311) target = $region44
        $region43: #{tpu_custom_call.1} parent=39 // pred_region
          %s314 = sand.u32 %s46, 1
          %s315 = scalar_lea.sflag [#allocation5], %s314
          %s316 = sand.u32 %s46, 1
          %s317 = smul.addr %s316, 8
          %s318 = scalar_lea.vmem [#allocation4], %s317
          %s320 = ssub.s32 128, 128
          %321 = vsyncadd %s315, %s320
          %s322 = smul.addr %s31, 2
          %s323 = smul.addr %s322, 64
          %s324 = scalar_lea.hbm %s0, %s323
          %s325 = sshll.u32 %s318, 4
          %s326 = int_to_ptr.vmem [resolvable:$true] %s325
          %331 = dma.hbm_to_vmem [thread:$0]  %s324, 128, %s326, %s315, 64, 64, 4
        $region44: #{tpu_custom_call.1} parent=39 // pred_fallthru
          _
        // Predicated region
        $region45: #{tpu_custom_call.1} parent=39 // pred_check
          %p332 = pneg %p84
        $region46: #{tpu_custom_call.1} parent=39 // pred_check_branch
          %334 = sbr.rel (%p332) target = $region48
        $region47: #{tpu_custom_call.1} parent=39 // pred_region
          %s335 = sand.u32 %s24, 1
          %s336 = scalar_lea.sflag [#allocation8], %s335
          %s337 = sand.u32 %s74, 1
          %s338 = smul.addr %s337, 8
          %s339 = scalar_lea.vmem [#allocation7], %s338
          %s341 = ssub.s32 128, 128
          %342 = vsyncadd %s336, %s341
          %s343 = smul.addr %s31, 2
          %s344 = sadd.s32 %s32, %s343
          %s345 = smul.addr %s344, 128
          %s346 = scalar_lea.hbm %s1, %s345
          %s348 = sshll.u32 %s339, 4
          %s349 = int_to_ptr.vmem [resolvable:$true] %s348
          %351 = dma.hbm_to_vmem [thread:$0]  %s346, 128, %s349, %s336
        $region48: #{tpu_custom_call.1} parent=39 // pred_fallthru
          _
      $region40: #{tpu_custom_call.1} parent=5 // pred_fallthru
        _
      %p352 = scmp.le.s32.totalorder 1, %s24
      %p353 = scmp.lt.s32.totalorder %s24, 5
      %p354 = pnand %p352, %p353
      %p355 = pneg %p354
      // Predicated region
      $region49: #{tpu_custom_call.1} parent=5 // pred_check
        _
      $region50: #{tpu_custom_call.1} parent=5 // pred_check_branch
        %357 = sbr.rel (%p354) target = $region52
      $region51: #{tpu_custom_call.1} parent=5 // pred_region
        %s358 = ssub.s32 %s24, 1
        %s359 = sand.u32 %s49, 1
        %s360 = scalar_lea.sflag [#allocation5], %s359
        %s361 = sand.u32 %s49, 1
        %s362 = smul.addr %s361, 8
        %s363 = scalar_lea.vmem [#allocation4], %s362
        // Predicated region
        $region53: #{tpu_custom_call.1} parent=51 // pred_check
          %p364 = pneg %p62
        $region54: #{tpu_custom_call.1} parent=51 // pred_check_branch
          %366 = sbr.rel (%p364) target = $region56
        $region55: #{tpu_custom_call.1} parent=51 // pred_region
          %367 = dma.done %s360, 128
        $region56: #{tpu_custom_call.1} parent=51 // pred_fallthru
          _
        %s368 = sand.u32 %s29, 1
        %s369 = scalar_lea.sflag [#allocation8], %s368
        %s370 = sand.u32 %s77, 1
        %s371 = smul.addr %s370, 8
        %s372 = scalar_lea.vmem [#allocation7], %s371
        // Predicated region
        $region57: #{tpu_custom_call.1} parent=51 // pred_check
          %p373 = pneg %p90
        $region58: #{tpu_custom_call.1} parent=51 // pred_check_branch
          %375 = sbr.rel (%p373) target = $region60
        $region59: #{tpu_custom_call.1} parent=51 // pred_region
          %376 = dma.done %s369, 128
        $region60: #{tpu_custom_call.1} parent=51 // pred_fallthru
          _
        // Predicated region
        $region61: #{tpu_custom_call.1} parent=51 // pred_check
          %p377 = pneg %p111
        $region62: #{tpu_custom_call.1} parent=51 // pred_check_branch
          %379 = sbr.rel (%p377) target = $region64
        $region63: #{tpu_custom_call.1} parent=51 // pred_region
          %380 = dma.done [#allocation8], 256
        $region64: #{tpu_custom_call.1} parent=51 // pred_fallthru
          _
        // Predicated region
        $region65: #{tpu_custom_call.1} parent=51 // pred_check
          %p381 = pneg %p153
        $region66: #{tpu_custom_call.1} parent=51 // pred_check_branch
          %383 = sbr.rel (%p381) target = $region68
        $region67: #{tpu_custom_call.1} parent=51 // pred_region
          %384 = dma.done [#allocation11], 256
        $region68: #{tpu_custom_call.1} parent=51 // pred_fallthru
          _
        // Predicated region
        $region69: #{tpu_custom_call.1} parent=51 // pred_check
          %p385 = pneg %p195
        $region70: #{tpu_custom_call.1} parent=51 // pred_check_branch
          %387 = sbr.rel (%p385) target = $region72
        $region71: #{tpu_custom_call.1} parent=51 // pred_region
          %388 = dma.done [#allocation11], 256
        $region72: #{tpu_custom_call.1} parent=51 // pred_fallthru
          _
        %s389 = sand.u32 %s49, 1
        %s390 = scalar_lea.sflag [#allocation5], %s389
        %s391 = sand.u32 %s49, 1
        %s392 = smul.addr %s391, 8
        %s393 = scalar_lea.vmem [#allocation4], %s392
        %p394 = pneg %p62
        %p395 = pneg %p59
        %s396 = sand.u32 %s29, 1
        %s397 = scalar_lea.sflag [#allocation8], %s396
        %s398 = sand.u32 %s77, 1
        %s399 = smul.addr %s398, 8
        %s400 = scalar_lea.vmem [#allocation7], %s399
        %p401 = pneg %p90
        %p402 = pneg %p87
        %p403 = pneg %p111
        %p404 = pneg %p108
        %p405 = pneg %p132
        %p406 = pneg %p129
        %p407 = pneg %p153
        %p408 = pneg %p150
        %p409 = pneg %p174
        %p410 = pneg %p171
        %p411 = pneg %p195
        %p412 = pneg %p192
        %p413 = pneg %p216
        %p414 = pneg %p213
        %p415 = pneg %p244
        %p416 = pneg %p241
        %s417 = sand.u32 %s231, 1
        %s418 = scalar_lea.sflag [#allocation6], %s417
        %s419 = sand.u32 %s231, 1
        %s420 = smul.addr %s419, 8
        %s421 = scalar_lea.vmem [#allocation13], %s420
        %p423 = scmp.eq.s32.totalorder %s34, 0
        // Predicated region
        $region73: #{tpu_custom_call.1} parent=51 // pred_check
          %p424 = pneg %p423
        $region74: #{tpu_custom_call.1} parent=51 // pred_check_branch
          %426 = sbr.rel (%p424) target = $region76
        $region75: #{tpu_custom_call.1} parent=51 // pred_region
          %v427 = vld [vmem:[%s363] sm:$0xf]
          %v428 = vld [vmem:[%s363 + $0x4] sm:$0xf]
          %v429 = vld [vmem:[#allocation10] sm:$0xf]
          %v430 = vld [vmem:[#allocation10 + $0x4] sm:$0xf]
          %v431 = vld [vmem:[#allocation10 + $0x8] sm:$0xf]
          %v432 = vld [vmem:[#allocation10 + $0xc] sm:$0xf]
          %v433 = vld [vmem:[%s5] sm:$0x1]
          %v435 = vlaneseq
          %v436 = vshrl.u32 %v435, 7
          %v437 = vsub.s32 0, %v436
          %v438 = vrot.slane %v433, %v437
          %v442 = vunpack.c.l.b16 %v427
          %v443 = vunpack.c.l.b16 %v428
          %v444 = vpack.c.b16 %v443, %v442
          %v449 = vunpack.c.l.b16 %v429
          %v450 = vunpack.c.l.b16 %v430
          %v451 = vunpack.c.l.b16 %v431
          %v452 = vunpack.c.l.b16 %v432
          %v453 = vpack.c.b16 %v450, %v449
          %v454 = vpack.c.b16 %v452, %v451
          %vm457 = vcmask 261120
          %v459 = vsel %vm457, %v444, 0
          %461 = vmatprep.subr.bf16.mxu0 0
          %462 = vmatpush1.bf16.msra.mxu0 0
          %463 = vmatprep.subr.bf16.mxu0 0
          %464 = vmatpush1.bf16.msra.mxu0 0
          %465 = vmatprep.subr.bf16.mxu0 0
          %466 = vmatpush1.bf16.msra.mxu0 0
          %467 = vmatprep.subr.bf16.mxu0 0
          %468 = vmatpush1.bf16.msra.mxu0 0
          %469 = vmatprep.subr.bf16.mxu0 0
          %470 = vmatpush1.bf16.msra.mxu0 0
          %471 = vmatprep.subr.bf16.mxu0 0
          %472 = vmatpush1.bf16.msra.mxu0 0
          %473 = vmatprep.subr.bf16.mxu0 0
          %474 = vmatpush1.bf16.msra.mxu0 %v454
          %475 = vmatprep.subr.bf16.mxu0 0
          %476 = vmatpush1.bf16.msra.mxu0 %v453
          %477 = vmatprep.subr.bf16.mxu0 0
          %478 = vmatpush2.bf16.msra.mxu0 0
          %479 = vmatprep.subr.bf16.mxu0 0
          %480 = vmatpush2.bf16.msra.mxu0 0
          %481 = vmatprep.subr.bf16.mxu0 0
          %482 = vmatpush2.bf16.msra.mxu0 0
          %483 = vmatprep.subr.bf16.mxu0 0
          %484 = vmatpush2.bf16.msra.mxu0 0
          %485 = vmatprep.subr.bf16.mxu0 0
          %486 = vmatpush2.bf16.msra.mxu0 0
          %487 = vmatprep.subr.bf16.mxu0 0
          %488 = vmatpush2.bf16.msra.mxu0 0
          %489 = vmatprep.subr.bf16.mxu0 0
          %490 = vmatpush2.bf16.msra.mxu0 0
          %491 = vmatprep.subr.bf16.mxu0 0
          %492 = vmatpush2.bf16.msra.mxu0 0
          %493 = vmatprep.mubr.bf16.mxu0 0
          %494 = vmatmul.mubr.bf16.gmra.mxu0 %v459
          %v495 = vpop.f32.mrf.mxu0
          %v496 = vadd.f32 %v438, %v495
          %v497 = vpop.f32.mrf.mxu0
          %v498 = vpop.f32.mrf.mxu0
          %v499 = vadd.f32 %v438, %v498
          %v500 = vpop.f32.mrf.mxu0
          %501 = vdwg.mxu0
          %v502 = vpack.c.bf16 %v499, %v496
          %v504 = vunpack.c.l.b16 %v502
          %v505 = vunpack.c.h.b16 %v502
          %v506 = vpack.c.b16 %v504, %v504
          %v507 = vpack.c.b16 %v505, %v505
          %vm510 = vcmask 519168
          %511 = vst.msk [vmem:[#allocation2] sm:$0xf] %vm510, %v506
          %512 = vst.msk [vmem:[#allocation2 + $0x4] sm:$0xf] %vm510, %v507
        $region76: #{tpu_custom_call.1} parent=51 // pred_fallthru
          _
        %v513 = vld [vmem:[%s372] sm:$0xff]
        %v514 = vpack.c.bf16 %v513, %v513
        %v515 = vld [vmem:[#allocation9] sm:$0xf]
        %v516 = vld [vmem:[#allocation9 + $0x4] sm:$0xf]
        %v517 = vld [vmem:[#allocation9 + $0x8] sm:$0xf]
        %v518 = vld [vmem:[#allocation9 + $0xc] sm:$0xf]
        %v519 = vld [vmem:[%s3] sm:$0x1]
        %v521 = vlaneseq
        %v522 = vshrl.u32 %v521, 7
        %v523 = vsub.s32 0, %v522
        %v524 = vrot.slane %v519, %v523
        %v530 = vunpack.c.l.b16 %v515
        %v531 = vunpack.c.l.b16 %v516
        %v532 = vunpack.c.l.b16 %v517
        %v533 = vunpack.c.l.b16 %v518
        %v534 = vpack.c.b16 %v531, %v530
        %v535 = vpack.c.b16 %v533, %v532
        %vm538 = vcmask 261120
        %v540 = vsel %vm538, %v514, 0
        %542 = vmatprep.subr.bf16.mxu0 0
        %543 = vmatpush1.bf16.msra.mxu0 0
        %544 = vmatprep.subr.bf16.mxu0 0
        %545 = vmatpush1.bf16.msra.mxu0 0
        %546 = vmatprep.subr.bf16.mxu0 0
        %547 = vmatpush1.bf16.msra.mxu0 0
        %548 = vmatprep.subr.bf16.mxu0 0
        %549 = vmatpush1.bf16.msra.mxu0 0
        %550 = vmatprep.subr.bf16.mxu0 0
        %551 = vmatpush1.bf16.msra.mxu0 0
        %552 = vmatprep.subr.bf16.mxu0 0
        %553 = vmatpush1.bf16.msra.mxu0 0
        %554 = vmatprep.subr.bf16.mxu0 0
        %555 = vmatpush1.bf16.msra.mxu0 %v535
        %556 = vmatprep.subr.bf16.mxu0 0
        %557 = vmatpush1.bf16.msra.mxu0 %v534
        %558 = vmatprep.subr.bf16.mxu0 0
        %559 = vmatpush2.bf16.msra.mxu0 0
        %560 = vmatprep.subr.bf16.mxu0 0
        %561 = vmatpush2.bf16.msra.mxu0 0
        %562 = vmatprep.subr.bf16.mxu0 0
        %563 = vmatpush2.bf16.msra.mxu0 0
        %564 = vmatprep.subr.bf16.mxu0 0
        %565 = vmatpush2.bf16.msra.mxu0 0
        %566 = vmatprep.subr.bf16.mxu0 0
        %567 = vmatpush2.bf16.msra.mxu0 0
        %568 = vmatprep.subr.bf16.mxu0 0
        %569 = vmatpush2.bf16.msra.mxu0 0
        %570 = vmatprep.subr.bf16.mxu0 0
        %571 = vmatpush2.bf16.msra.mxu0 0
        %572 = vmatprep.subr.bf16.mxu0 0
        %573 = vmatpush2.bf16.msra.mxu0 0
        %574 = vmatprep.mubr.bf16.mxu0 0
        %575 = vmatmul.mubr.bf16.gmra.mxu0 %v540
        %v576 = vpop.f32.mrf.mxu0
        %v577 = vadd.f32 %v524, %v576
        %v578 = vpop.f32.mrf.mxu0
        %v579 = vpop.f32.mrf.mxu0
        %v580 = vpop.f32.mrf.mxu0
        %581 = vdwg.mxu0
        %v582 = vpack.c.bf16 %v577, %v577
        %v583 = vld [vmem:[#allocation2] sm:$0xf]
        %v584 = vld [vmem:[#allocation2 + $0x4] sm:$0xf]
        %v587 = vunpack.c.l.b16 %v583
        %v588 = vunpack.c.l.b16 %v584
        %v589 = vpack.c.b16 %v588, %v587
        %vm590 = vcmask 64512
        %v592 = vsel %vm590, %v582, 0
        %v595 = vsel %vm590, %v589, 0
        %597 = vmatprep.subr.bf16.mxu0 0
        %598 = vmatpush1.bf16.xpose.msra.mxu0 0
        %599 = vmatprep.subr.bf16.mxu0 0
        %600 = vmatpush1.bf16.xpose.msra.mxu0 0
        %601 = vmatprep.subr.bf16.mxu0 0
        %602 = vmatpush1.bf16.xpose.msra.mxu0 0
        %603 = vmatprep.subr.bf16.mxu0 0
        %604 = vmatpush1.bf16.xpose.msra.mxu0 0
        %605 = vmatprep.subr.bf16.mxu0 0
        %606 = vmatpush1.bf16.xpose.msra.mxu0 0
        %607 = vmatprep.subr.bf16.mxu0 0
        %608 = vmatpush1.bf16.xpose.msra.mxu0 0
        %609 = vmatprep.subr.bf16.mxu0 0
        %610 = vmatpush1.bf16.xpose.msra.mxu0 0
        %611 = vmatprep.subr.bf16.mxu0 0
        %612 = vmatpush1.bf16.xpose.msra.mxu0 %v595
        %613 = vmatprep.subr.bf16.mxu0 0
        %614 = vmatpush2.bf16.xpose.msra.mxu0 0
        %615 = vmatprep.subr.bf16.mxu0 0
        %616 = vmatpush2.bf16.xpose.msra.mxu0 0
        %617 = vmatprep.subr.bf16.mxu0 0
        %618 = vmatpush2.bf16.xpose.msra.mxu0 0
        %619 = vmatprep.subr.bf16.mxu0 0
        %620 = vmatpush2.bf16.xpose.msra.mxu0 0
        %621 = vmatprep.subr.bf16.mxu0 0
        %622 = vmatpush2.bf16.xpose.msra.mxu0 0
        %623 = vmatprep.subr.bf16.mxu0 0
        %624 = vmatpush2.bf16.xpose.msra.mxu0 0
        %625 = vmatprep.subr.bf16.mxu0 0
        %626 = vmatpush2.bf16.xpose.msra.mxu0 0
        %627 = vmatprep.subr.bf16.mxu0 0
        %628 = vmatpush2.bf16.xpose.msra.mxu0 0
        %629 = vmatprep.mubr.bf16.mxu0 0
        %630 = vmatmul.mubr.bf16.gmra.mxu0 %v592
        %v631 = vpop.f32.mrf.mxu0
        %v632 = vadd.f32 0.0, %v631
        %v633 = vpop.f32.mrf.mxu0
        %v634 = vpop.f32.mrf.mxu0
        %v635 = vpop.f32.mrf.mxu0
        %636 = vdwg.mxu0
        %vm637 = vcmask 130048
        %v638 = vsel %vm637, %v632, -inf
        %639 = vmax.xlane.f32.xlu0 %v638
        %v640 = vpop.xlane.xlu0 %639
        %v641 = vsub.f32 %v632, %v640
        %v642 = vpow.pop %v641
        %v643 = vsel %vm637, %v642, 0.0
        %644 = vadd.xlane.f32.xlu0 %v643
        %v645 = vpop.xlane.xlu0 %644
        %v646 = vpack.c.bf16 %v642, %v642
        %647 = vrot.lane.b32.xlu0 %v589, 96
        %v648 = vpop.permute.xlu0 %647
        %v651 = vsel %vm637, %v646, 0
        %653 = vmatprep.subr.bf16.mxu0 0
        %654 = vmatpush1.bf16.msra.mxu0 0
        %655 = vmatprep.subr.bf16.mxu0 0
        %656 = vmatpush1.bf16.msra.mxu0 0
        %657 = vmatprep.subr.bf16.mxu0 0
        %658 = vmatpush1.bf16.msra.mxu0 0
        %659 = vmatprep.subr.bf16.mxu0 0
        %660 = vmatpush1.bf16.msra.mxu0 0
        %661 = vmatprep.subr.bf16.mxu0 0
        %662 = vmatpush1.bf16.msra.mxu0 0
        %663 = vmatprep.subr.bf16.mxu0 0
        %664 = vmatpush1.bf16.msra.mxu0 0
        %665 = vmatprep.subr.bf16.mxu0 0
        %666 = vmatpush1.bf16.msra.mxu0 0
        %667 = vmatprep.subr.bf16.mxu0 0
        %668 = vmatpush1.bf16.msra.mxu0 %v648
        %669 = vmatprep.subr.bf16.mxu0 0
        %670 = vmatpush2.bf16.msra.mxu0 0
        %671 = vmatprep.subr.bf16.mxu0 0
        %672 = vmatpush2.bf16.msra.mxu0 0
        %673 = vmatprep.subr.bf16.mxu0 0
        %674 = vmatpush2.bf16.msra.mxu0 0
        %675 = vmatprep.subr.bf16.mxu0 0
        %676 = vmatpush2.bf16.msra.mxu0 0
        %677 = vmatprep.subr.bf16.mxu0 0
        %678 = vmatpush2.bf16.msra.mxu0 0
        %679 = vmatprep.subr.bf16.mxu0 0
        %680 = vmatpush2.bf16.msra.mxu0 0
        %681 = vmatprep.subr.bf16.mxu0 0
        %682 = vmatpush2.bf16.msra.mxu0 0
        %683 = vmatprep.subr.bf16.mxu0 0
        %684 = vmatpush2.bf16.msra.mxu0 0
        %685 = vmatprep.mubr.bf16.mxu0 0
        %686 = vmatmul.mubr.bf16.gmra.mxu0 %v651
        %v687 = vpop.f32.mrf.mxu0
        %v688 = vadd.f32 0.0, %v687
        %v689 = vpop.f32.mrf.mxu0
        %v690 = vpop.f32.mrf.mxu0
        %v691 = vpop.f32.mrf.mxu0
        %692 = vdwg.mxu0
        %v693 = vrcp.pop %v645
        %v694 = vmul.f32 %v688, %v693
        %695 = vst.msk [vmem:[#allocation3] sm:$0xff] %vm590, %v694
        %v696 = vld [vmem:[#allocation2] sm:$0xf]
        %v697 = vld [vmem:[#allocation2 + $0x4] sm:$0xf]
        %699 = vrot.lane.b32.xlu0 %v582, 120
        %v700 = vpop.permute.xlu0 %699
        %v703 = vunpack.c.l.b16 %v696
        %v704 = vunpack.c.l.b16 %v697
        %v705 = vpack.c.b16 %v704, %v703
        %706 = vrot.lane.b32.xlu0 %v705, 120
        %v707 = vpop.permute.xlu0 %706
        %v709 = vsel %vm590, %v700, 0
        %v712 = vsel %vm590, %v707, 0
        %714 = vmatprep.subr.bf16.mxu0 0
        %715 = vmatpush1.bf16.xpose.msra.mxu0 0
        %716 = vmatprep.subr.bf16.mxu0 0
        %717 = vmatpush1.bf16.xpose.msra.mxu0 0
        %718 = vmatprep.subr.bf16.mxu0 0
        %719 = vmatpush1.bf16.xpose.msra.mxu0 0
        %720 = vmatprep.subr.bf16.mxu0 0
        %721 = vmatpush1.bf16.xpose.msra.mxu0 0
        %722 = vmatprep.subr.bf16.mxu0 0
        %723 = vmatpush1.bf16.xpose.msra.mxu0 0
        %724 = vmatprep.subr.bf16.mxu0 0
        %725 = vmatpush1.bf16.xpose.msra.mxu0 0
        %726 = vmatprep.subr.bf16.mxu0 0
        %727 = vmatpush1.bf16.xpose.msra.mxu0 0
        %728 = vmatprep.subr.bf16.mxu0 0
        %729 = vmatpush1.bf16.xpose.msra.mxu0 %v712
        %730 = vmatprep.subr.bf16.mxu0 0
        %731 = vmatpush2.bf16.xpose.msra.mxu0 0
        %732 = vmatprep.subr.bf16.mxu0 0
        %733 = vmatpush2.bf16.xpose.msra.mxu0 0
        %734 = vmatprep.subr.bf16.mxu0 0
        %735 = vmatpush2.bf16.xpose.msra.mxu0 0
        %736 = vmatprep.subr.bf16.mxu0 0
        %737 = vmatpush2.bf16.xpose.msra.mxu0 0
        %738 = vmatprep.subr.bf16.mxu0 0
        %739 = vmatpush2.bf16.xpose.msra.mxu0 0
        %740 = vmatprep.subr.bf16.mxu0 0
        %741 = vmatpush2.bf16.xpose.msra.mxu0 0
        %742 = vmatprep.subr.bf16.mxu0 0
        %743 = vmatpush2.bf16.xpose.msra.mxu0 0
        %744 = vmatprep.subr.bf16.mxu0 0
        %745 = vmatpush2.bf16.xpose.msra.mxu0 0
        %746 = vmatprep.mubr.bf16.mxu0 0
        %747 = vmatmul.mubr.bf16.gmra.mxu0 %v709
        %v748 = vpop.f32.mrf.mxu0
        %v749 = vadd.f32 0.0, %v748
        %v750 = vpop.f32.mrf.mxu0
        %v751 = vpop.f32.mrf.mxu0
        %v752 = vpop.f32.mrf.mxu0
        %753 = vdwg.mxu0
        %v754 = vsel %vm637, %v749, -inf
        %755 = vmax.xlane.f32.xlu0 %v754
        %v756 = vpop.xlane.xlu0 %755
        %v757 = vsub.f32 %v749, %v756
        %v758 = vpow.pop %v757
        %v759 = vsel %vm637, %v758, 0.0
        %760 = vadd.xlane.f32.xlu0 %v759
        %v761 = vpop.xlane.xlu0 %760
        %v762 = vpack.c.bf16 %v758, %v758
        %763 = vrot.lane.b32.xlu0 %v705, 88
        %v764 = vpop.permute.xlu0 %763
        %v767 = vsel %vm637, %v762, 0
        %769 = vmatprep.subr.bf16.mxu0 0
        %770 = vmatpush1.bf16.msra.mxu0 0
        %771 = vmatprep.subr.bf16.mxu0 0
        %772 = vmatpush1.bf16.msra.mxu0 0
        %773 = vmatprep.subr.bf16.mxu0 0
        %774 = vmatpush1.bf16.msra.mxu0 0
        %775 = vmatprep.subr.bf16.mxu0 0
        %776 = vmatpush1.bf16.msra.mxu0 0
        %777 = vmatprep.subr.bf16.mxu0 0
        %778 = vmatpush1.bf16.msra.mxu0 0
        %779 = vmatprep.subr.bf16.mxu0 0
        %780 = vmatpush1.bf16.msra.mxu0 0
        %781 = vmatprep.subr.bf16.mxu0 0
        %782 = vmatpush1.bf16.msra.mxu0 0
        %783 = vmatprep.subr.bf16.mxu0 0
        %784 = vmatpush1.bf16.msra.mxu0 %v764
        %785 = vmatprep.subr.bf16.mxu0 0
        %786 = vmatpush2.bf16.msra.mxu0 0
        %787 = vmatprep.subr.bf16.mxu0 0
        %788 = vmatpush2.bf16.msra.mxu0 0
        %789 = vmatprep.subr.bf16.mxu0 0
        %790 = vmatpush2.bf16.msra.mxu0 0
        %791 = vmatprep.subr.bf16.mxu0 0
        %792 = vmatpush2.bf16.msra.mxu0 0
        %793 = vmatprep.subr.bf16.mxu0 0
        %794 = vmatpush2.bf16.msra.mxu0 0
        %795 = vmatprep.subr.bf16.mxu0 0
        %796 = vmatpush2.bf16.msra.mxu0 0
        %797 = vmatprep.subr.bf16.mxu0 0
        %798 = vmatpush2.bf16.msra.mxu0 0
        %799 = vmatprep.subr.bf16.mxu0 0
        %800 = vmatpush2.bf16.msra.mxu0 0
        %801 = vmatprep.mubr.bf16.mxu0 0
        %802 = vmatmul.mubr.bf16.gmra.mxu0 %v767
        %v803 = vpop.f32.mrf.mxu0
        %v804 = vadd.f32 0.0, %v803
        %v805 = vpop.f32.mrf.mxu0
        %v806 = vpop.f32.mrf.mxu0
        %v807 = vpop.f32.mrf.mxu0
        %808 = vdwg.mxu0
        %v809 = vrcp.pop %v761
        %v810 = vmul.f32 %v804, %v809
        %812 = vrot.lane.b32.xlu0 %v810, 8
        %v813 = vpop.permute.xlu0 %812
        %vm815 = vcmask 130112
        %816 = vst.msk [vmem:[#allocation3] sm:$0xff] %vm815, %v813
        %v817 = vld [vmem:[#allocation2] sm:$0xf]
        %v818 = vld [vmem:[#allocation2 + $0x4] sm:$0xf]
        %819 = vrot.lane.b32.xlu0 %v582, 112
        %v820 = vpop.permute.xlu0 %819
        %v823 = vunpack.c.l.b16 %v817
        %v824 = vunpack.c.l.b16 %v818
        %v825 = vpack.c.b16 %v824, %v823
        %826 = vrot.lane.b32.xlu0 %v825, 112
        %v827 = vpop.permute.xlu0 %826
        %v829 = vsel %vm590, %v820, 0
        %v832 = vsel %vm590, %v827, 0
        %834 = vmatprep.subr.bf16.mxu0 0
        %835 = vmatpush1.bf16.xpose.msra.mxu0 0
        %836 = vmatprep.subr.bf16.mxu0 0
        %837 = vmatpush1.bf16.xpose.msra.mxu0 0
        %838 = vmatprep.subr.bf16.mxu0 0
        %839 = vmatpush1.bf16.xpose.msra.mxu0 0
        %840 = vmatprep.subr.bf16.mxu0 0
        %841 = vmatpush1.bf16.xpose.msra.mxu0 0
        %842 = vmatprep.subr.bf16.mxu0 0
        %843 = vmatpush1.bf16.xpose.msra.mxu0 0
        %844 = vmatprep.subr.bf16.mxu0 0
        %845 = vmatpush1.bf16.xpose.msra.mxu0 0
        %846 = vmatprep.subr.bf16.mxu0 0
        %847 = vmatpush1.bf16.xpose.msra.mxu0 0
        %848 = vmatprep.subr.bf16.mxu0 0
        %849 = vmatpush1.bf16.xpose.msra.mxu0 %v832
        %850 = vmatprep.subr.bf16.mxu0 0
        %851 = vmatpush2.bf16.xpose.msra.mxu0 0
        %852 = vmatprep.subr.bf16.mxu0 0
        %853 = vmatpush2.bf16.xpose.msra.mxu0 0
        %854 = vmatprep.subr.bf16.mxu0 0
        %855 = vmatpush2.bf16.xpose.msra.mxu0 0
        %856 = vmatprep.subr.bf16.mxu0 0
        %857 = vmatpush2.bf16.xpose.msra.mxu0 0
        %858 = vmatprep.subr.bf16.mxu0 0
        %859 = vmatpush2.bf16.xpose.msra.mxu0 0
        %860 = vmatprep.subr.bf16.mxu0 0
        %861 = vmatpush2.bf16.xpose.msra.mxu0 0
        %862 = vmatprep.subr.bf16.mxu0 0
        %863 = vmatpush2.bf16.xpose.msra.mxu0 0
        %864 = vmatprep.subr.bf16.mxu0 0
        %865 = vmatpush2.bf16.xpose.msra.mxu0 0
        %866 = vmatprep.mubr.bf16.mxu0 0
        %867 = vmatmul.mubr.bf16.gmra.mxu0 %v829
        %v868 = vpop.f32.mrf.mxu0
        %v869 = vadd.f32 0.0, %v868
        %v870 = vpop.f32.mrf.mxu0
        %v871 = vpop.f32.mrf.mxu0
        %v872 = vpop.f32.mrf.mxu0
        %873 = vdwg.mxu0
        %v874 = vsel %vm637, %v869, -inf
        %875 = vmax.xlane.f32.xlu0 %v874
        %v876 = vpop.xlane.xlu0 %875
        %v877 = vsub.f32 %v869, %v876
        %v878 = vpow.pop %v877
        %v879 = vsel %vm637, %v878, 0.0
        %880 = vadd.xlane.f32.xlu0 %v879
        %v881 = vpop.xlane.xlu0 %880
        %v882 = vpack.c.bf16 %v878, %v878
        %883 = vrot.lane.b32.xlu0 %v825, 80
        %v884 = vpop.permute.xlu0 %883
        %v887 = vsel %vm637, %v882, 0
        %889 = vmatprep.subr.bf16.mxu0 0
        %890 = vmatpush1.bf16.msra.mxu0 0
        %891 = vmatprep.subr.bf16.mxu0 0
        %892 = vmatpush1.bf16.msra.mxu0 0
        %893 = vmatprep.subr.bf16.mxu0 0
        %894 = vmatpush1.bf16.msra.mxu0 0
        %895 = vmatprep.subr.bf16.mxu0 0
        %896 = vmatpush1.bf16.msra.mxu0 0
        %897 = vmatprep.subr.bf16.mxu0 0
        %898 = vmatpush1.bf16.msra.mxu0 0
        %899 = vmatprep.subr.bf16.mxu0 0
        %900 = vmatpush1.bf16.msra.mxu0 0
        %901 = vmatprep.subr.bf16.mxu0 0
        %902 = vmatpush1.bf16.msra.mxu0 0
        %903 = vmatprep.subr.bf16.mxu0 0
        %904 = vmatpush1.bf16.msra.mxu0 %v884
        %905 = vmatprep.subr.bf16.mxu0 0
        %906 = vmatpush2.bf16.msra.mxu0 0
        %907 = vmatprep.subr.bf16.mxu0 0
        %908 = vmatpush2.bf16.msra.mxu0 0
        %909 = vmatprep.subr.bf16.mxu0 0
        %910 = vmatpush2.bf16.msra.mxu0 0
        %911 = vmatprep.subr.bf16.mxu0 0
        %912 = vmatpush2.bf16.msra.mxu0 0
        %913 = vmatprep.subr.bf16.mxu0 0
        %914 = vmatpush2.bf16.msra.mxu0 0
        %915 = vmatprep.subr.bf16.mxu0 0
        %916 = vmatpush2.bf16.msra.mxu0 0
        %917 = vmatprep.subr.bf16.mxu0 0
        %918 = vmatpush2.bf16.msra.mxu0 0
        %919 = vmatprep.subr.bf16.mxu0 0
        %920 = vmatpush2.bf16.msra.mxu0 0
        %921 = vmatprep.mubr.bf16.mxu0 0
        %922 = vmatmul.mubr.bf16.gmra.mxu0 %v887
        %v923 = vpop.f32.mrf.mxu0
        %v924 = vadd.f32 0.0, %v923
        %v925 = vpop.f32.mrf.mxu0
        %v926 = vpop.f32.mrf.mxu0
        %v927 = vpop.f32.mrf.mxu0
        %928 = vdwg.mxu0
        %v929 = vrcp.pop %v881
        %v930 = vmul.f32 %v924, %v929
        %932 = vrot.lane.b32.xlu0 %v930, 16
        %v933 = vpop.permute.xlu0 %932
        %vm935 = vcmask 195712
        %936 = vst.msk [vmem:[#allocation3] sm:$0xff] %vm935, %v933
        %v937 = vld [vmem:[#allocation2] sm:$0xf]
        %v938 = vld [vmem:[#allocation2 + $0x4] sm:$0xf]
        %939 = vrot.lane.b32.xlu0 %v582, 104
        %v940 = vpop.permute.xlu0 %939
        %v943 = vunpack.c.l.b16 %v937
        %v944 = vunpack.c.l.b16 %v938
        %v945 = vpack.c.b16 %v944, %v943
        %946 = vrot.lane.b32.xlu0 %v945, 104
        %v947 = vpop.permute.xlu0 %946
        %v949 = vsel %vm590, %v940, 0
        %v952 = vsel %vm590, %v947, 0
        %954 = vmatprep.subr.bf16.mxu0 0
        %955 = vmatpush1.bf16.xpose.msra.mxu0 0
        %956 = vmatprep.subr.bf16.mxu0 0
        %957 = vmatpush1.bf16.xpose.msra.mxu0 0
        %958 = vmatprep.subr.bf16.mxu0 0
        %959 = vmatpush1.bf16.xpose.msra.mxu0 0
        %960 = vmatprep.subr.bf16.mxu0 0
        %961 = vmatpush1.bf16.xpose.msra.mxu0 0
        %962 = vmatprep.subr.bf16.mxu0 0
        %963 = vmatpush1.bf16.xpose.msra.mxu0 0
        %964 = vmatprep.subr.bf16.mxu0 0
        %965 = vmatpush1.bf16.xpose.msra.mxu0 0
        %966 = vmatprep.subr.bf16.mxu0 0
        %967 = vmatpush1.bf16.xpose.msra.mxu0 0
        %968 = vmatprep.subr.bf16.mxu0 0
        %969 = vmatpush1.bf16.xpose.msra.mxu0 %v952
        %970 = vmatprep.subr.bf16.mxu0 0
        %971 = vmatpush2.bf16.xpose.msra.mxu0 0
        %972 = vmatprep.subr.bf16.mxu0 0
        %973 = vmatpush2.bf16.xpose.msra.mxu0 0
        %974 = vmatprep.subr.bf16.mxu0 0
        %975 = vmatpush2.bf16.xpose.msra.mxu0 0
        %976 = vmatprep.subr.bf16.mxu0 0
        %977 = vmatpush2.bf16.xpose.msra.mxu0 0
        %978 = vmatprep.subr.bf16.mxu0 0
        %979 = vmatpush2.bf16.xpose.msra.mxu0 0
        %980 = vmatprep.subr.bf16.mxu0 0
        %981 = vmatpush2.bf16.xpose.msra.mxu0 0
        %982 = vmatprep.subr.bf16.mxu0 0
        %983 = vmatpush2.bf16.xpose.msra.mxu0 0
        %984 = vmatprep.subr.bf16.mxu0 0
        %985 = vmatpush2.bf16.xpose.msra.mxu0 0
        %986 = vmatprep.mubr.bf16.mxu0 0
        %987 = vmatmul.mubr.bf16.gmra.mxu0 %v949
        %v988 = vpop.f32.mrf.mxu0
        %v989 = vadd.f32 0.0, %v988
        %v990 = vpop.f32.mrf.mxu0
        %v991 = vpop.f32.mrf.mxu0
        %v992 = vpop.f32.mrf.mxu0
        %993 = vdwg.mxu0
        %v994 = vsel %vm637, %v989, -inf
        %995 = vmax.xlane.f32.xlu0 %v994
        %v996 = vpop.xlane.xlu0 %995
        %v997 = vsub.f32 %v989, %v996
        %v998 = vpow.pop %v997
        %v999 = vsel %vm637, %v998, 0.0
        %1000 = vadd.xlane.f32.xlu0 %v999
        %v1001 = vpop.xlane.xlu0 %1000
        %v1002 = vpack.c.bf16 %v998, %v998
        %1003 = vrot.lane.b32.xlu0 %v945, 72
        %v1004 = vpop.permute.xlu0 %1003
        %v1007 = vsel %vm637, %v1002, 0
        %1009 = vmatprep.subr.bf16.mxu0 0
        %1010 = vmatpush1.bf16.msra.mxu0 0
        %1011 = vmatprep.subr.bf16.mxu0 0
        %1012 = vmatpush1.bf16.msra.mxu0 0
        %1013 = vmatprep.subr.bf16.mxu0 0
        %1014 = vmatpush1.bf16.msra.mxu0 0
        %1015 = vmatprep.subr.bf16.mxu0 0
        %1016 = vmatpush1.bf16.msra.mxu0 0
        %1017 = vmatprep.subr.bf16.mxu0 0
        %1018 = vmatpush1.bf16.msra.mxu0 0
        %1019 = vmatprep.subr.bf16.mxu0 0
        %1020 = vmatpush1.bf16.msra.mxu0 0
        %1021 = vmatprep.subr.bf16.mxu0 0
        %1022 = vmatpush1.bf16.msra.mxu0 0
        %1023 = vmatprep.subr.bf16.mxu0 0
        %1024 = vmatpush1.bf16.msra.mxu0 %v1004
        %1025 = vmatprep.subr.bf16.mxu0 0
        %1026 = vmatpush2.bf16.msra.mxu0 0
        %1027 = vmatprep.subr.bf16.mxu0 0
        %1028 = vmatpush2.bf16.msra.mxu0 0
        %1029 = vmatprep.subr.bf16.mxu0 0
        %1030 = vmatpush2.bf16.msra.mxu0 0
        %1031 = vmatprep.subr.bf16.mxu0 0
        %1032 = vmatpush2.bf16.msra.mxu0 0
        %1033 = vmatprep.subr.bf16.mxu0 0
        %1034 = vmatpush2.bf16.msra.mxu0 0
        %1035 = vmatprep.subr.bf16.mxu0 0
        %1036 = vmatpush2.bf16.msra.mxu0 0
        %1037 = vmatprep.subr.bf16.mxu0 0
        %1038 = vmatpush2.bf16.msra.mxu0 0
        %1039 = vmatprep.subr.bf16.mxu0 0
        %1040 = vmatpush2.bf16.msra.mxu0 0
        %1041 = vmatprep.mubr.bf16.mxu0 0
        %1042 = vmatmul.mubr.bf16.gmra.mxu0 %v1007
        %v1043 = vpop.f32.mrf.mxu0
        %v1044 = vadd.f32 0.0, %v1043
        %v1045 = vpop.f32.mrf.mxu0
        %v1046 = vpop.f32.mrf.mxu0
        %v1047 = vpop.f32.mrf.mxu0
        %1048 = vdwg.mxu0
        %v1049 = vrcp.pop %v1001
        %v1050 = vmul.f32 %v1044, %v1049
        %1052 = vrot.lane.b32.xlu0 %v1050, 24
        %v1053 = vpop.permute.xlu0 %1052
        %vm1055 = vcmask 261312
        %1056 = vst.msk [vmem:[#allocation3] sm:$0xff] %vm1055, %v1053
        %v1057 = vld [vmem:[#allocation3] sm:$0xff]
        %v1058 = vpack.c.bf16 %v1057, %v1057
        %v1059 = vld [vmem:[#allocation12] sm:$0xf]
        %v1060 = vld [vmem:[#allocation12 + $0x4] sm:$0xf]
        %v1061 = vld [vmem:[#allocation12 + $0x8] sm:$0xf]
        %v1062 = vld [vmem:[#allocation12 + $0xc] sm:$0xf]
        %v1063 = vld [vmem:[%s7] sm:$0x1]
        %v1065 = vlaneseq
        %v1066 = vshrl.u32 %v1065, 7
        %v1067 = vsub.s32 0, %v1066
        %v1068 = vrot.slane %v1063, %v1067
        %v1074 = vunpack.c.l.b16 %v1059
        %v1075 = vunpack.c.l.b16 %v1060
        %v1076 = vunpack.c.l.b16 %v1061
        %v1077 = vunpack.c.l.b16 %v1062
        %v1078 = vpack.c.b16 %v1075, %v1074
        %v1079 = vpack.c.b16 %v1077, %v1076
        %v1083 = vsel %vm538, %v1058, 0
        %1085 = vmatprep.subr.bf16.mxu0 0
        %1086 = vmatpush1.bf16.msra.mxu0 0
        %1087 = vmatprep.subr.bf16.mxu0 0
        %1088 = vmatpush1.bf16.msra.mxu0 0
        %1089 = vmatprep.subr.bf16.mxu0 0
        %1090 = vmatpush1.bf16.msra.mxu0 0
        %1091 = vmatprep.subr.bf16.mxu0 0
        %1092 = vmatpush1.bf16.msra.mxu0 0
        %1093 = vmatprep.subr.bf16.mxu0 0
        %1094 = vmatpush1.bf16.msra.mxu0 0
        %1095 = vmatprep.subr.bf16.mxu0 0
        %1096 = vmatpush1.bf16.msra.mxu0 0
        %1097 = vmatprep.subr.bf16.mxu0 0
        %1098 = vmatpush1.bf16.msra.mxu0 %v1079
        %1099 = vmatprep.subr.bf16.mxu0 0
        %1100 = vmatpush1.bf16.msra.mxu0 %v1078
        %1101 = vmatprep.subr.bf16.mxu0 0
        %1102 = vmatpush2.bf16.msra.mxu0 0
        %1103 = vmatprep.subr.bf16.mxu0 0
        %1104 = vmatpush2.bf16.msra.mxu0 0
        %1105 = vmatprep.subr.bf16.mxu0 0
        %1106 = vmatpush2.bf16.msra.mxu0 0
        %1107 = vmatprep.subr.bf16.mxu0 0
        %1108 = vmatpush2.bf16.msra.mxu0 0
        %1109 = vmatprep.subr.bf16.mxu0 0
        %1110 = vmatpush2.bf16.msra.mxu0 0
        %1111 = vmatprep.subr.bf16.mxu0 0
        %1112 = vmatpush2.bf16.msra.mxu0 0
        %1113 = vmatprep.subr.bf16.mxu0 0
        %1114 = vmatpush2.bf16.msra.mxu0 0
        %1115 = vmatprep.subr.bf16.mxu0 0
        %1116 = vmatpush2.bf16.msra.mxu0 0
        %1117 = vmatprep.mubr.bf16.mxu0 0
        %1118 = vmatmul.mubr.bf16.gmra.mxu0 %v1083
        %v1119 = vpop.f32.mrf.mxu0
        %v1120 = vadd.f32 %v1068, %v1119
        %v1121 = vpop.f32.mrf.mxu0
        %v1122 = vpop.f32.mrf.mxu0
        %v1123 = vpop.f32.mrf.mxu0
        %1124 = vdwg.mxu0
        %v1125 = vadd.f32 %v513, %v1120
        %1126 = vst.msk [vmem:[%s421] sm:$0xff] %vm538, %v1125
        %s1127 = sand.u32 %s231, 1
        %s1128 = scalar_lea.sflag [#allocation6], %s1127
        %s1129 = sand.u32 %s231, 1
        %s1130 = smul.addr %s1129, 8
        %s1131 = scalar_lea.vmem [#allocation13], %s1130
        // Predicated region
        $region77: #{tpu_custom_call.1} parent=51 // pred_check
          %p1132 = pneg %p241
        $region78: #{tpu_custom_call.1} parent=51 // pred_check_branch
          %1134 = sbr.rel (%p1132) target = $region80
        $region79: #{tpu_custom_call.1} parent=51 // pred_region
          %s1136 = ssub.s32 128, 128
          %1137 = vsyncadd %s1128, %s1136
          %s1138 = smul.addr %s33, 2
          %s1139 = sadd.s32 %s34, %s1138
          %s1140 = smul.addr %s1139, 128
          %s1141 = scalar_lea.hbm %s8, %s1140
          %s1143 = sshll.u32 %s1131, 4
          %s1144 = int_to_ptr.vmem [resolvable:$true] %s1143
          %1146 = dma.vmem_to_hbm [thread:$0]  %s1144, 128, %s1141, %s1128
        $region80: #{tpu_custom_call.1} parent=51 // pred_fallthru
          _
      $region52: #{tpu_custom_call.1} parent=5 // pred_fallthru
        _
      %p1147 = scmp.le.s32.totalorder 2, %s24
      // Predicated region
      $region81: #{tpu_custom_call.1} parent=5 // pred_check
        %p1148 = pneg %p1147
      $region82: #{tpu_custom_call.1} parent=5 // pred_check_branch
        %1150 = sbr.rel (%p1148) target = $region84
      $region83: #{tpu_custom_call.1} parent=5 // pred_region
        %s1151 = ssub.s32 %s24, 2
        // Predicated region
        $region85: #{tpu_custom_call.1} parent=83 // pred_check
          %p1152 = pneg %p247
        $region86: #{tpu_custom_call.1} parent=83 // pred_check_branch
          %1154 = sbr.rel (%p1152) target = $region88
        $region87: #{tpu_custom_call.1} parent=83 // pred_region
          %s1155 = sand.u32 %s232, 1
          %s1156 = scalar_lea.sflag [#allocation6], %s1155
          %s1157 = sand.u32 %s232, 1
          %s1158 = smul.addr %s1157, 8
          %s1159 = scalar_lea.vmem [#allocation13], %s1158
          %1160 = dma.done %s1156, 128
        $region88: #{tpu_custom_call.1} parent=83 // pred_fallthru
          _
      $region84: #{tpu_custom_call.1} parent=5 // pred_fallthru
        _
    $region6: #{tpu_custom_call.1} parent=1 // loop_footer
      %s28 = sadd.s32 1, %s24
    $region7: #{tpu_custom_call.1} parent=1 // loop_footer_branch
      %23 = sbr.rel target = $region3
    $region8: #{tpu_custom_call.1} parent=1 // loop_exit
      _
    %1161 = vsyncpa [#allocation5], 1
    %s1162 = scalar_lea.sflag [#allocation5], 1
    %1163 = vsyncpa %s1162, 1
    %1164 = vsyncpa [#allocation8], 1
    %s1165 = scalar_lea.sflag [#allocation8], 1
    %1166 = vsyncpa %s1165, 1
    %1167 = vsyncpa [#allocation11], 1
    %1168 = vsyncpa [#allocation6], 1
    %s1169 = scalar_lea.sflag [#allocation6], 1
    %1170 = vsyncpa %s1169, 1

// kernel: tpu_custom_call.1
$region0: #{tpu_custom_call.1}
  #allocation0 [shape = 'u32[]', space=smem, size = 0x4, offset = 0x4, fixed_abs, tag = 'smem constant byte address 0x4 - core index']
  #allocation1 [shape = 'u32[144,128]{1,0:T(1,128)}', space=vmem, size = 0x12000, scoped, tag = 'internal scratch']
  #allocation2 [shape = 'bf16[16,64]{1,0:T(8,128)(2,1)}', space=vmem, size = 0x1000, scoped, tag = 'scratch operand']
  #allocation3 [shape = 'f32[8,32]{1,0:T(8,128)}', space=vmem, size = 0x1000, scoped, tag = 'scratch operand']
  %s0 = inlined_call_operand.hbm [shape: bf16[2,16,32], index: 0, kind: input, shape index: {}]
  %s1 = inlined_call_operand.hbm [shape: f32[2,16,32], index: 1, kind: input, shape index: {}]
  %s2 = inlined_call_operand.hbm [shape: bf16[32,32], index: 2, kind: input, shape index: {}]
  %s3 = inlined_call_operand.vmem [shape: f32[1,32], index: 3, kind: input, shape index: {}]
  %s4 = inlined_call_operand.hbm [shape: bf16[32,64], index: 4, kind: input, shape index: {}]
  %s5 = inlined_call_operand.vmem [shape: f32[1,64], index: 5, kind: input, shape index: {}]
  %s6 = inlined_call_operand.hbm [shape: bf16[32,32], index: 6, kind: input, shape index: {}]
  %s7 = inlined_call_operand.vmem [shape: f32[1,32], index: 7, kind: input, shape index: {}]
  %s8 = inlined_call_operand.hbm [shape: f32[2,16,32], index: 8, kind: output, shape index: {}]
  %s9 = sld [smem:[#allocation0]]
  $region89: #{tpu_custom_call.1} parent=0
    _
  %s11 = ssub.s32 1, %s9
  %s12 = scalar_select 0, %s11, %s9
  $region1: #{tpu_custom_call.1} parent=0
    #allocation4 [shape = 'u8[8192]{0}', space=vmem, size = 0x2000, scoped, tag = 'input window, operand 0']
    #allocation5 [shape = 's32[2]{0}', space=sflag, size = 0x8, scoped, tag = 'scoped memory for tpu_custom_call.1']
    #allocation6 [shape = 's32[2]{0}', space=sflag, size = 0x8, scoped, tag = 'scoped memory for tpu_custom_call.1']
    #allocation7 [shape = 'u8[8192]{0}', space=vmem, size = 0x2000, scoped, tag = 'input window, operand 1']
    #allocation8 [shape = 's32[2]{0}', space=sflag, size = 0x8, scoped, tag = 'scoped memory for tpu_custom_call.1']
    #allocation9 [shape = 'u8[8192]{0}', space=vmem, size = 0x2000, scoped, tag = 'input window, operand 2, single buffered']
    #allocation10 [shape = 'u8[8192]{0}', space=vmem, size = 0x2000, scoped, tag = 'input window, operand 4, single buffered']
    #allocation11 [shape = 's32[1]{0}', space=sflag, size = 0x4, scoped, tag = 'scoped memory for tpu_custom_call.1']
    #allocation12 [shape = 'u8[8192]{0}', space=vmem, size = 0x2000, scoped, tag = 'input window, operand 6, single buffered']
    #allocation13 [shape = 'u8[8192]{0}', space=vmem, size = 0x2000, scoped, tag = 'output window, operand 0']
    %13 = vsyncpa [#allocation5], 0
    %s14 = scalar_lea.sflag [#allocation5], 1
    %15 = vsyncpa %s14, 0
    %16 = vsyncpa [#allocation8], 0
    %s17 = scalar_lea.sflag [#allocation8], 1
    %18 = vsyncpa %s17, 0
    %19 = vsyncpa [#allocation11], 0
    %20 = vsyncpa [#allocation6], 0
    %s21 = scalar_lea.sflag [#allocation6], 1
    %22 = vsyncpa %s21, 0
    loop: start=0, step=1, limit=6
    $region2: #{tpu_custom_call.1} parent=1 // loop_pre_header
      _
    $region3: #{tpu_custom_call.1} parent=1 // loop_header
      %s24 = sphi 0, %s28
      %p25 = scmp.ge.s32.totalorder %s24, 6
      %s31 = sphi 0, %s43
      %s32 = sphi 0, %s39
      %s33 = sphi 0, %s31
      %s34 = sphi 0, %s32
      %s35 = sphi 0, %s33
      %s36 = sphi 0, %s34
      %s46 = sphi 0, %s48
      %s49 = sphi 0, %s46
      %s50 = sphi 0, %s49
      %s66 = sphi 0, %s50
      %s74 = sphi 0, %s76
      %s77 = sphi 0, %s74
      %s78 = sphi 0, %s77
      %s94 = sphi 0, %s78
      %s98 = sphi 0, %s98
      %s100 = sphi 0, %s98
      %s101 = sphi 0, %s100
      %s115 = sphi 0, %s101
      %s119 = sphi 0, %s119
      %s121 = sphi 0, %s119
      %s122 = sphi 0, %s121
      %s136 = sphi 0, %s122
      %s140 = sphi 0, %s140
      %s142 = sphi 0, %s140
      %s143 = sphi 0, %s142
      %s157 = sphi 0, %s143
      %s161 = sphi 0, %s161
      %s163 = sphi 0, %s161
      %s164 = sphi 0, %s163
      %s178 = sphi 0, %s164
      %s182 = sphi 0, %s182
      %s184 = sphi 0, %s182
      %s185 = sphi 0, %s184
      %s199 = sphi 0, %s185
      %s203 = sphi 0, %s203
      %s205 = sphi 0, %s203
      %s206 = sphi 0, %s205
      %s220 = sphi 0, %s206
      %s228 = sphi 0, %s230
      %s231 = sphi 0, %s228
      %s232 = sphi 0, %s231
      %s248 = sphi 0, %s232
    $region4: #{tpu_custom_call.1} parent=1 // loop_header_branch
      %27 = sbr.rel (%p25) target = $region8
    $region5: #{tpu_custom_call.1} parent=1 // loop_body
      %s29 = ssub.s32 %s24, 1
      %s30 = ssub.s32 %s24, 2
      %s37 = sadd.s32 1, %s32
      %p38 = scmp.ge.s32.totalorder %s37, 2
      %s39 = scalar_select %p38, 0, %s37
      %s40 = sadd.s32 1, %s31
      %s41 = scalar_select %p38, %s40, %s31
      %p42 = scmp.ge.s32.totalorder %s41, 2
      %s43 = scalar_select %p42, 0, %s41
      %s44 = ssub.s32 %s31, %s43
      %p45 = scmp.eq.s32.totalorder %s44, 0
      %s47 = sadd.s32 %s46, 1
      %s48 = scalar_select %p45, %s46, %s47
      %p51 = pneg %p45
      %p52 = scmp.eq.s32.totalorder %s24, 3
      %p53 = por %p51, %p52
      %p54 = scmp.ne.s32.totalorder %s46, %s49
      %p55 = scmp.eq.s32.totalorder %s24, 0
      %p56 = por %p54, %p55
      %p57 = scmp.ne.s32.totalorder %s46, %s49
      %p58 = scmp.eq.s32.totalorder %s29, 3
      %p59 = por %p57, %p58
      %p60 = scmp.ne.s32.totalorder %s49, %s50
      %p61 = scmp.eq.s32.totalorder %s29, 0
      %p62 = por %p60, %p61
      %p63 = scmp.ne.s32.totalorder %s49, %s50
      %p64 = scmp.eq.s32.totalorder %s30, 3
      %p65 = por %p63, %p64
      %p67 = scmp.ne.s32.totalorder %s50, %s66
      %p68 = scmp.eq.s32.totalorder %s30, 0
      %p69 = por %p67, %p68
      %s70 = ssub.s32 %s31, %s43
      %s71 = ssub.s32 %s32, %s39
      %s72 = sor.u32 %s70, %s71
      %p73 = scmp.eq.s32.totalorder %s72, 0
      %s75 = sadd.s32 %s74, 1
      %s76 = scalar_select %p73, %s74, %s75
      %p79 = pneg %p73
      %p80 = scmp.eq.s32.totalorder %s24, 3
      %p81 = por %p79, %p80
      %p82 = scmp.ne.s32.totalorder %s74, %s77
      %p83 = scmp.eq.s32.totalorder %s24, 0
      %p84 = por %p82, %p83
      %p85 = scmp.ne.s32.totalorder %s74, %s77
      %p86 = scmp.eq.s32.totalorder %s29, 3
      %p87 = por %p85, %p86
      %p88 = scmp.ne.s32.totalorder %s77, %s78
      %p89 = scmp.eq.s32.totalorder %s29, 0
      %p90 = por %p88, %p89
      %p91 = scmp.ne.s32.totalorder %s77, %s78
      %p92 = scmp.eq.s32.totalorder %s30, 3
      %p93 = por %p91, %p92
      %p95 = scmp.ne.s32.totalorder %s78, %s94
      %p96 = scmp.eq.s32.totalorder %s30, 0
      %p97 = por %p95, %p96
      %s99 = sadd.s32 %s98, 1
      %p102 = scmp.eq.s32.totalorder %s24, 3
      %p103 = scmp.ne.s32.totalorder %s98, %s100
      %p104 = scmp.eq.s32.totalorder %s24, 0
      %p105 = por %p103, %p104
      %p106 = scmp.ne.s32.totalorder %s98, %s100
      %p107 = scmp.eq.s32.totalorder %s29, 3
      %p108 = por %p106, %p107
      %p109 = scmp.ne.s32.totalorder %s100, %s101
      %p110 = scmp.eq.s32.totalorder %s29, 0
      %p111 = por %p109, %p110
      %p112 = scmp.ne.s32.totalorder %s100, %s101
      %p113 = scmp.eq.s32.totalorder %s30, 3
      %p114 = por %p112, %p113
      %p116 = scmp.ne.s32.totalorder %s101, %s115
      %p117 = scmp.eq.s32.totalorder %s30, 0
      %p118 = por %p116, %p117
      %s120 = sadd.s32 %s119, 1
      %p123 = scmp.eq.s32.totalorder %s24, 3
      %p124 = scmp.ne.s32.totalorder %s119, %s121
      %p125 = scmp.eq.s32.totalorder %s24, 0
      %p126 = por %p124, %p125
      %p127 = scmp.ne.s32.totalorder %s119, %s121
      %p128 = scmp.eq.s32.totalorder %s29, 3
      %p129 = por %p127, %p128
      %p130 = scmp.ne.s32.totalorder %s121, %s122
      %p131 = scmp.eq.s32.totalorder %s29, 0
      %p132 = por %p130, %p131
      %p133 = scmp.ne.s32.totalorder %s121, %s122
      %p134 = scmp.eq.s32.totalorder %s30, 3
      %p135 = por %p133, %p134
      %p137 = scmp.ne.s32.totalorder %s122, %s136
      %p138 = scmp.eq.s32.totalorder %s30, 0
      %p139 = por %p137, %p138
      %s141 = sadd.s32 %s140, 1
      %p144 = scmp.eq.s32.totalorder %s24, 3
      %p145 = scmp.ne.s32.totalorder %s140, %s142
      %p146 = scmp.eq.s32.totalorder %s24, 0
      %p147 = por %p145, %p146
      %p148 = scmp.ne.s32.totalorder %s140, %s142
      %p149 = scmp.eq.s32.totalorder %s29, 3
      %p150 = por %p148, %p149
      %p151 = scmp.ne.s32.totalorder %s142, %s143
      %p152 = scmp.eq.s32.totalorder %s29, 0
      %p153 = por %p151, %p152
      %p154 = scmp.ne.s32.totalorder %s142, %s143
      %p155 = scmp.eq.s32.totalorder %s30, 3
      %p156 = por %p154, %p155
      %p158 = scmp.ne.s32.totalorder %s143, %s157
      %p159 = scmp.eq.s32.totalorder %s30, 0
      %p160 = por %p158, %p159
      %s162 = sadd.s32 %s161, 1
      %p165 = scmp.eq.s32.totalorder %s24, 3
      %p166 = scmp.ne.s32.totalorder %s161, %s163
      %p167 = scmp.eq.s32.totalorder %s24, 0
      %p168 = por %p166, %p167
      %p169 = scmp.ne.s32.totalorder %s161, %s163
      %p170 = scmp.eq.s32.totalorder %s29, 3
      %p171 = por %p169, %p170
      %p172 = scmp.ne.s32.totalorder %s163, %s164
      %p173 = scmp.eq.s32.totalorder %s29, 0
      %p174 = por %p172, %p173
      %p175 = scmp.ne.s32.totalorder %s163, %s164
      %p176 = scmp.eq.s32.totalorder %s30, 3
      %p177 = por %p175, %p176
      %p179 = scmp.ne.s32.totalorder %s164, %s178
      %p180 = scmp.eq.s32.totalorder %s30, 0
      %p181 = por %p179, %p180
      %s183 = sadd.s32 %s182, 1
      %p186 = scmp.eq.s32.totalorder %s24, 3
      %p187 = scmp.ne.s32.totalorder %s182, %s184
      %p188 = scmp.eq.s32.totalorder %s24, 0
      %p189 = por %p187, %p188
      %p190 = scmp.ne.s32.totalorder %s182, %s184
      %p191 = scmp.eq.s32.totalorder %s29, 3
      %p192 = por %p190, %p191
      %p193 = scmp.ne.s32.totalorder %s184, %s185
      %p194 = scmp.eq.s32.totalorder %s29, 0
      %p195 = por %p193, %p194
      %p196 = scmp.ne.s32.totalorder %s184, %s185
      %p197 = scmp.eq.s32.totalorder %s30, 3
      %p198 = por %p196, %p197
      %p200 = scmp.ne.s32.totalorder %s185, %s199
      %p201 = scmp.eq.s32.totalorder %s30, 0
      %p202 = por %p200, %p201
      %s204 = sadd.s32 %s203, 1
      %p207 = scmp.eq.s32.totalorder %s24, 3
      %p208 = scmp.ne.s32.totalorder %s203, %s205
      %p209 = scmp.eq.s32.totalorder %s24, 0
      %p210 = por %p208, %p209
      %p211 = scmp.ne.s32.totalorder %s203, %s205
      %p212 = scmp.eq.s32.totalorder %s29, 3
      %p213 = por %p211, %p212
      %p214 = scmp.ne.s32.totalorder %s205, %s206
      %p215 = scmp.eq.s32.totalorder %s29, 0
      %p216 = por %p214, %p215
      %p217 = scmp.ne.s32.totalorder %s205, %s206
      %p218 = scmp.eq.s32.totalorder %s30, 3
      %p219 = por %p217, %p218
      %p221 = scmp.ne.s32.totalorder %s206, %s220
      %p222 = scmp.eq.s32.totalorder %s30, 0
      %p223 = por %p221, %p222
      %s224 = ssub.s32 %s31, %s43
      %s225 = ssub.s32 %s32, %s39
      %s226 = sor.u32 %s224, %s225
      %p227 = scmp.eq.s32.totalorder %s226, 0
      %s229 = sadd.s32 %s228, 1
      %s230 = scalar_select %p227, %s228, %s229
      %p233 = pneg %p227
      %p234 = scmp.eq.s32.totalorder %s24, 3
      %p235 = por %p233, %p234
      %p236 = scmp.ne.s32.totalorder %s228, %s231
      %p237 = scmp.eq.s32.totalorder %s24, 0
      %p238 = por %p236, %p237
      %p239 = scmp.ne.s32.totalorder %s228, %s231
      %p240 = scmp.eq.s32.totalorder %s29, 3
      %p241 = por %p239, %p240
      %p242 = scmp.ne.s32.totalorder %s231, %s232
      %p243 = scmp.eq.s32.totalorder %s29, 0
      %p244 = por %p242, %p243
      %p245 = scmp.ne.s32.totalorder %s231, %s232
      %p246 = scmp.eq.s32.totalorder %s30, 3
      %p247 = por %p245, %p246
      %p249 = scmp.ne.s32.totalorder %s232, %s248
      %p250 = scmp.eq.s32.totalorder %s30, 0
      %p251 = por %p249, %p250
      %p252 = scmp.le.s32.totalorder 1, %s24
      %p253 = scmp.lt.s32.totalorder %s24, 5
      %p254 = pnand %p252, %p253
      %p255 = pneg %p254
      // Predicated region
      $region9: #{tpu_custom_call.1} parent=5 // pred_check
        _
      $region10: #{tpu_custom_call.1} parent=5 // pred_check_branch
        %257 = sbr.rel (%p254) target = $region12
      $region11: #{tpu_custom_call.1} parent=5 // pred_region
        %s258 = ssub.s32 %s24, 1
        // Predicated region
        $region13: #{tpu_custom_call.1} parent=11 // pred_check
          %p259 = pneg %p111
        $region14: #{tpu_custom_call.1} parent=11 // pred_check_branch
          %261 = sbr.rel (%p259) target = $region16
        $region15: #{tpu_custom_call.1} parent=11 // pred_region
          %s263 = ssub.s32 256, 256
          %264 = vsyncadd [#allocation8], %s263
          %s265 = sshll.u32 [#allocation9], 4
          %s266 = int_to_ptr.vmem [resolvable:$true] %s265
          %271 = dma.hbm_to_vmem [thread:$0]  %s2, 256, %s266, [#allocation8], 64, 64, 4
        $region16: #{tpu_custom_call.1} parent=11 // pred_fallthru
          _
        // Predicated region
        $region17: #{tpu_custom_call.1} parent=11 // pred_check
          %p272 = pneg %p132
        $region18: #{tpu_custom_call.1} parent=11 // pred_check_branch
          %274 = sbr.rel (%p272) target = $region20
        $region19: #{tpu_custom_call.1} parent=11 // pred_region
          _
        $region20: #{tpu_custom_call.1} parent=11 // pred_fallthru
          _
        // Predicated region
        $region21: #{tpu_custom_call.1} parent=11 // pred_check
          %p275 = pneg %p153
        $region22: #{tpu_custom_call.1} parent=11 // pred_check_branch
          %277 = sbr.rel (%p275) target = $region24
        $region23: #{tpu_custom_call.1} parent=11 // pred_region
          %s279 = ssub.s32 256, 256
          %280 = vsyncadd [#allocation11], %s279
          %s281 = sshll.u32 [#allocation10], 4
          %s282 = int_to_ptr.vmem [resolvable:$true] %s281
          %287 = dma.hbm_to_vmem [thread:$0]  %s4, 256, %s282, [#allocation11], 64, 64, 4
        $region24: #{tpu_custom_call.1} parent=11 // pred_fallthru
          _
        // Predicated region
        $region25: #{tpu_custom_call.1} parent=11 // pred_check
          %p288 = pneg %p174
        $region26: #{tpu_custom_call.1} parent=11 // pred_check_branch
          %290 = sbr.rel (%p288) target = $region28
        $region27: #{tpu_custom_call.1} parent=11 // pred_region
          _
        $region28: #{tpu_custom_call.1} parent=11 // pred_fallthru
          _
        // Predicated region
        $region29: #{tpu_custom_call.1} parent=11 // pred_check
          %p291 = pneg %p195
        $region30: #{tpu_custom_call.1} parent=11 // pred_check_branch
          %293 = sbr.rel (%p291) target = $region32
        $region31: #{tpu_custom_call.1} parent=11 // pred_region
          %s295 = ssub.s32 256, 256
          %296 = vsyncadd [#allocation11], %s295
          %s297 = sshll.u32 [#allocation12], 4
          %s298 = int_to_ptr.vmem [resolvable:$true] %s297
          %303 = dma.hbm_to_vmem [thread:$0]  %s6, 256, %s298, [#allocation11], 64, 64, 4
        $region32: #{tpu_custom_call.1} parent=11 // pred_fallthru
          _
        // Predicated region
        $region33: #{tpu_custom_call.1} parent=11 // pred_check
          %p304 = pneg %p216
        $region34: #{tpu_custom_call.1} parent=11 // pred_check_branch
          %306 = sbr.rel (%p304) target = $region36
        $region35: #{tpu_custom_call.1} parent=11 // pred_region
          _
        $region36: #{tpu_custom_call.1} parent=11 // pred_fallthru
          _
      $region12: #{tpu_custom_call.1} parent=5 // pred_fallthru
        _
      %p307 = scmp.lt.s32.totalorder %s24, 4
      // Predicated region
      $region37: #{tpu_custom_call.1} parent=5 // pred_check
        %p308 = pneg %p307
      $region38: #{tpu_custom_call.1} parent=5 // pred_check_branch
        %310 = sbr.rel (%p308) target = $region40
      $region39: #{tpu_custom_call.1} parent=5 // pred_region
        // Predicated region
        $region41: #{tpu_custom_call.1} parent=39 // pred_check
          %p311 = pneg %p56
        $region42: #{tpu_custom_call.1} parent=39 // pred_check_branch
          %313 = sbr.rel (%p311) target = $region44
        $region43: #{tpu_custom_call.1} parent=39 // pred_region
          %s314 = sand.u32 %s46, 1
          %s315 = scalar_lea.sflag [#allocation5], %s314
          %s316 = sand.u32 %s46, 1
          %s317 = smul.addr %s316, 8
          %s318 = scalar_lea.vmem [#allocation4], %s317
          %s320 = ssub.s32 128, 128
          %321 = vsyncadd %s315, %s320
          %s322 = smul.addr %s31, 2
          %s323 = smul.addr %s322, 64
          %s324 = scalar_lea.hbm %s0, %s323
          %s325 = sshll.u32 %s318, 4
          %s326 = int_to_ptr.vmem [resolvable:$true] %s325
          %331 = dma.hbm_to_vmem [thread:$0]  %s324, 128, %s326, %s315, 64, 64, 4
        $region44: #{tpu_custom_call.1} parent=39 // pred_fallthru
          _
        // Predicated region
        $region45: #{tpu_custom_call.1} parent=39 // pred_check
          %p332 = pneg %p84
        $region46: #{tpu_custom_call.1} parent=39 // pred_check_branch
          %334 = sbr.rel (%p332) target = $region48
        $region47: #{tpu_custom_call.1} parent=39 // pred_region
          %s335 = sand.u32 %s24, 1
          %s336 = scalar_lea.sflag [#allocation8], %s335
          %s337 = sand.u32 %s74, 1
          %s338 = smul.addr %s337, 8
          %s339 = scalar_lea.vmem [#allocation7], %s338
          %s341 = ssub.s32 128, 128
          %342 = vsyncadd %s336, %s341
          %s343 = smul.addr %s31, 2
          %s344 = sadd.s32 %s32, %s343
          %s345 = smul.addr %s344, 128
          %s346 = scalar_lea.hbm %s1, %s345
          %s348 = sshll.u32 %s339, 4
          %s349 = int_to_ptr.vmem [resolvable:$true] %s348
          %351 = dma.hbm_to_vmem [thread:$0]  %s346, 128, %s349, %s336
        $region48: #{tpu_custom_call.1} parent=39 // pred_fallthru
          _
      $region40: #{tpu_custom_call.1} parent=5 // pred_fallthru
        _
      %p352 = scmp.le.s32.totalorder 1, %s24
      %p353 = scmp.lt.s32.totalorder %s24, 5
      %p354 = pnand %p352, %p353
      %p355 = pneg %p354
      // Predicated region
      $region49: #{tpu_custom_call.1} parent=5 // pred_check
        _
      $region50: #{tpu_custom_call.1} parent=5 // pred_check_branch
        %357 = sbr.rel (%p354) target = $region52
      $region51: #{tpu_custom_call.1} parent=5 // pred_region
        %s358 = ssub.s32 %s24, 1
        %s359 = sand.u32 %s49, 1
        %s360 = scalar_lea.sflag [#allocation5], %s359
        %s361 = sand.u32 %s49, 1
        %s362 = smul.addr %s361, 8
        %s363 = scalar_lea.vmem [#allocation4], %s362
        // Predicated region
        $region53: #{tpu_custom_call.1} parent=51 // pred_check
          %p364 = pneg %p62
        $region54: #{tpu_custom_call.1} parent=51 // pred_check_branch
          %366 = sbr.rel (%p364) target = $region56
        $region55: #{tpu_custom_call.1} parent=51 // pred_region
          %367 = dma.done %s360, 128
        $region56: #{tpu_custom_call.1} parent=51 // pred_fallthru
          _
        %s368 = sand.u32 %s29, 1
        %s369 = scalar_lea.sflag [#allocation8], %s368
        %s370 = sand.u32 %s77, 1
        %s371 = smul.addr %s370, 8
        %s372 = scalar_lea.vmem [#allocation7], %s371
        // Predicated region
        $region57: #{tpu_custom_call.1} parent=51 // pred_check
          %p373 = pneg %p90
        $region58: #{tpu_custom_call.1} parent=51 // pred_check_branch
          %375 = sbr.rel (%p373) target = $region60
        $region59: #{tpu_custom_call.1} parent=51 // pred_region
          %376 = dma.done %s369, 128
        $region60: #{tpu_custom_call.1} parent=51 // pred_fallthru
          _
        // Predicated region
        $region61: #{tpu_custom_call.1} parent=51 // pred_check
          %p377 = pneg %p111
        $region62: #{tpu_custom_call.1} parent=51 // pred_check_branch
          %379 = sbr.rel (%p377) target = $region64
        $region63: #{tpu_custom_call.1} parent=51 // pred_region
          %380 = dma.done [#allocation8], 256
        $region64: #{tpu_custom_call.1} parent=51 // pred_fallthru
          _
        // Predicated region
        $region65: #{tpu_custom_call.1} parent=51 // pred_check
          %p381 = pneg %p153
        $region66: #{tpu_custom_call.1} parent=51 // pred_check_branch
          %383 = sbr.rel (%p381) target = $region68
        $region67: #{tpu_custom_call.1} parent=51 // pred_region
          %384 = dma.done [#allocation11], 256
        $region68: #{tpu_custom_call.1} parent=51 // pred_fallthru
          _
        // Predicated region
        $region69: #{tpu_custom_call.1} parent=51 // pred_check
          %p385 = pneg %p195
        $region70: #{tpu_custom_call.1} parent=51 // pred_check_branch
          %387 = sbr.rel (%p385) target = $region72
        $region71: #{tpu_custom_call.1} parent=51 // pred_region
          %388 = dma.done [#allocation11], 256
        $region72: #{tpu_custom_call.1} parent=51 // pred_fallthru
          _
        %s389 = sand.u32 %s49, 1
        %s390 = scalar_lea.sflag [#allocation5], %s389
        %s391 = sand.u32 %s49, 1
        %s392 = smul.addr %s391, 8
        %s393 = scalar_lea.vmem [#allocation4], %s392
        %p394 = pneg %p62
        %p395 = pneg %p59
        %s396 = sand.u32 %s29, 1
        %s397 = scalar_lea.sflag [#allocation8], %s396
        %s398 = sand.u32 %s77, 1
        %s399 = smul.addr %s398, 8
        %s400 = scalar_lea.vmem [#allocation7], %s399
        %p401 = pneg %p90
        %p402 = pneg %p87
        %p403 = pneg %p111
        %p404 = pneg %p108
        %p405 = pneg %p132
        %p406 = pneg %p129
        %p407 = pneg %p153
        %p408 = pneg %p150
        %p409 = pneg %p174
        %p410 = pneg %p171
        %p411 = pneg %p195
        %p412 = pneg %p192
        %p413 = pneg %p216
        %p414 = pneg %p213
        %p415 = pneg %p244
        %p416 = pneg %p241
        %s417 = sand.u32 %s231, 1
        %s418 = scalar_lea.sflag [#allocation6], %s417
        %s419 = sand.u32 %s231, 1
        %s420 = smul.addr %s419, 8
        %s421 = scalar_lea.vmem [#allocation13], %s420
        %p423 = scmp.eq.s32.totalorder %s34, 0
        // Predicated region
        $region73: #{tpu_custom_call.1} parent=51 // pred_check
          %p424 = pneg %p423
        $region74: #{tpu_custom_call.1} parent=51 // pred_check_branch
          %426 = sbr.rel (%p424) target = $region76
        $region75: #{tpu_custom_call.1} parent=51 // pred_region
          %v427 = vld [vmem:[%s363] sm:$0xf]
          %v428 = vld [vmem:[%s363 + $0x4] sm:$0xf]
          %v429 = vld [vmem:[#allocation10] sm:$0xf]
          %v430 = vld [vmem:[#allocation10 + $0x4] sm:$0xf]
          %v431 = vld [vmem:[#allocation10 + $0x8] sm:$0xf]
          %v432 = vld [vmem:[#allocation10 + $0xc] sm:$0xf]
          %v433 = vld [vmem:[%s5] sm:$0x1]
          %v435 = vlaneseq
          %v436 = vshrl.u32 %v435, 7
          %v437 = vsub.s32 0, %v436
          %v438 = vrot.slane %v433, %v437
          %v442 = vunpack.c.l.b16 %v427
          %v443 = vunpack.c.l.b16 %v428
          %v444 = vpack.c.b16 %v443, %v442
          %v449 = vunpack.c.l.b16 %v429
          %v450 = vunpack.c.l.b16 %v430
          %v451 = vunpack.c.l.b16 %v431
          %v452 = vunpack.c.l.b16 %v432
          %v453 = vpack.c.b16 %v450, %v449
          %v454 = vpack.c.b16 %v452, %v451
          %vm457 = vcmask 261120
          %v459 = vsel %vm457, %v444, 0
          %461 = vmatprep.subr.bf16.mxu0 0
          %462 = vmatpush1.bf16.msra.mxu0 0
          %463 = vmatprep.subr.bf16.mxu0 0
          %464 = vmatpush1.bf16.msra.mxu0 0
          %465 = vmatprep.subr.bf16.mxu0 0
          %466 = vmatpush1.bf16.msra.mxu0 0
          %467 = vmatprep.subr.bf16.mxu0 0
          %468 = vmatpush1.bf16.msra.mxu0 0
          %469 = vmatprep.subr.bf16.mxu0 0
          %470 = vmatpush1.bf16.msra.mxu0 0
          %471 = vmatprep.subr.bf16.mxu0 0
          %472 = vmatpush1.bf16.msra.mxu0 0
          %473 = vmatprep.subr.bf16.mxu0 0
          %474 = vmatpush1.bf16.msra.mxu0 %v454
          %475 = vmatprep.subr.bf16.mxu0 0
          %476 = vmatpush1.bf16.msra.mxu0 %v453
          %477 = vmatprep.subr.bf16.mxu0 0
          %478 = vmatpush2.bf16.msra.mxu0 0
          %479 = vmatprep.subr.bf16.mxu0 0
          %480 = vmatpush2.bf16.msra.mxu0 0
          %481 = vmatprep.subr.bf16.mxu0 0
          %482 = vmatpush2.bf16.msra.mxu0 0
          %483 = vmatprep.subr.bf16.mxu0 0
          %484 = vmatpush2.bf16.msra.mxu0 0
          %485 = vmatprep.subr.bf16.mxu0 0
          %486 = vmatpush2.bf16.msra.mxu0 0
          %487 = vmatprep.subr.bf16.mxu0 0
          %488 = vmatpush2.bf16.msra.mxu0 0
          %489 = vmatprep.subr.bf16.mxu0 0
          %490 = vmatpush2.bf16.msra.mxu0 0
          %491 = vmatprep.subr.bf16.mxu0 0
          %492 = vmatpush2.bf16.msra.mxu0 0
          %493 = vmatprep.mubr.bf16.mxu0 0
          %494 = vmatmul.mubr.bf16.gmra.mxu0 %v459
          %v495 = vpop.f32.mrf.mxu0
          %v496 = vadd.f32 %v438, %v495
          %v497 = vpop.f32.mrf.mxu0
          %v498 = vpop.f32.mrf.mxu0
          %v499 = vadd.f32 %v438, %v498
          %v500 = vpop.f32.mrf.mxu0
          %501 = vdwg.mxu0
          %v502 = vpack.c.bf16 %v499, %v496
          %v504 = vunpack.c.l.b16 %v502
          %v505 = vunpack.c.h.b16 %v502
          %v506 = vpack.c.b16 %v504, %v504
          %v507 = vpack.c.b16 %v505, %v505
          %vm510 = vcmask 519168
          %511 = vst.msk [vmem:[#allocation2] sm:$0xf] %vm510, %v506
          %512 = vst.msk [vmem:[#allocation2 + $0x4] sm:$0xf] %vm510, %v507
        $region76: #{tpu_custom_call.1} parent=51 // pred_fallthru
          _
        %v513 = vld [vmem:[%s372] sm:$0xff]
        %v514 = vpack.c.bf16 %v513, %v513
        %v515 = vld [vmem:[#allocation9] sm:$0xf]
        %v516 = vld [vmem:[#allocation9 + $0x4] sm:$0xf]
        %v517 = vld [vmem:[#allocation9 + $0x8] sm:$0xf]
        %v518 = vld [vmem:[#allocation9 + $0xc] sm:$0xf]
        %v519 = vld [vmem:[%s3] sm:$0x1]
        %v521 = vlaneseq
        %v522 = vshrl.u32 %v521, 7
        %v523 = vsub.s32 0, %v522
        %v524 = vrot.slane %v519, %v523
        %v530 = vunpack.c.l.b16 %v515
        %v531 = vunpack.c.l.b16 %v516
        %v532 = vunpack.c.l.b16 %v517
        %v533 = vunpack.c.l.b16 %v518
        %v534 = vpack.c.b16 %v531, %v530
        %v535 = vpack.c.b16 %v533, %v532
        %vm538 = vcmask 261120
        %v540 = vsel %vm538, %v514, 0
        %542 = vmatprep.subr.bf16.mxu0 0
        %543 = vmatpush1.bf16.msra.mxu0 0
        %544 = vmatprep.subr.bf16.mxu0 0
        %545 = vmatpush1.bf16.msra.mxu0 0
        %546 = vmatprep.subr.bf16.mxu0 0
        %547 = vmatpush1.bf16.msra.mxu0 0
        %548 = vmatprep.subr.bf16.mxu0 0
        %549 = vmatpush1.bf16.msra.mxu0 0
        %550 = vmatprep.subr.bf16.mxu0 0
        %551 = vmatpush1.bf16.msra.mxu0 0
        %552 = vmatprep.subr.bf16.mxu0 0
        %553 = vmatpush1.bf16.msra.mxu0 0
        %554 = vmatprep.subr.bf16.mxu0 0
        %555 = vmatpush1.bf16.msra.mxu0 %v535
        %556 = vmatprep.subr.bf16.mxu0 0
        %557 = vmatpush1.bf16.msra.mxu0 %v534
        %558 = vmatprep.subr.bf16.mxu0 0
        %559 = vmatpush2.bf16.msra.mxu0 0
        %560 = vmatprep.subr.bf16.mxu0 0
        %561 = vmatpush2.bf16.msra.mxu0 0
        %562 = vmatprep.subr.bf16.mxu0 0
        %563 = vmatpush2.bf16.msra.mxu0 0
        %564 = vmatprep.subr.bf16.mxu0 0
        %565 = vmatpush2.bf16.msra.mxu0 0
        %566 = vmatprep.subr.bf16.mxu0 0
        %567 = vmatpush2.bf16.msra.mxu0 0
        %568 = vmatprep.subr.bf16.mxu0 0
        %569 = vmatpush2.bf16.msra.mxu0 0
        %570 = vmatprep.subr.bf16.mxu0 0
        %571 = vmatpush2.bf16.msra.mxu0 0
        %572 = vmatprep.subr.bf16.mxu0 0
        %573 = vmatpush2.bf16.msra.mxu0 0
        %574 = vmatprep.mubr.bf16.mxu0 0
        %575 = vmatmul.mubr.bf16.gmra.mxu0 %v540
        %v576 = vpop.f32.mrf.mxu0
        %v577 = vadd.f32 %v524, %v576
        %v578 = vpop.f32.mrf.mxu0
        %v579 = vpop.f32.mrf.mxu0
        %v580 = vpop.f32.mrf.mxu0
        %581 = vdwg.mxu0
        %v582 = vpack.c.bf16 %v577, %v577
        %v583 = vld [vmem:[#allocation2] sm:$0xf]
        %v584 = vld [vmem:[#allocation2 + $0x4] sm:$0xf]
        %v587 = vunpack.c.l.b16 %v583
        %v588 = vunpack.c.l.b16 %v584
        %v589 = vpack.c.b16 %v588, %v587
        %vm590 = vcmask 64512
        %v592 = vsel %vm590, %v582, 0
        %v595 = vsel %vm590, %v589, 0
        %597 = vmatprep.subr.bf16.mxu0 0
        %598 = vmatpush1.bf16.xpose.msra.mxu0 0
        %599 = vmatprep.subr.bf16.mxu0 0
        %600 = vmatpush1.bf16.xpose.msra.mxu0 0
        %601 = vmatprep.subr.bf16.mxu0 0
        %602 = vmatpush1.bf16.xpose.msra.mxu0 0
        %603 = vmatprep.subr.bf16.mxu0 0
        %604 = vmatpush1.bf16.xpose.msra.mxu0 0
        %605 = vmatprep.subr.bf16.mxu0 0
        %606 = vmatpush1.bf16.xpose.msra.mxu0 0
        %607 = vmatprep.subr.bf16.mxu0 0
        %608 = vmatpush1.bf16.xpose.msra.mxu0 0
        %609 = vmatprep.subr.bf16.mxu0 0
        %610 = vmatpush1.bf16.xpose.msra.mxu0 0
        %611 = vmatprep.subr.bf16.mxu0 0
        %612 = vmatpush1.bf16.xpose.msra.mxu0 %v595
        %613 = vmatprep.subr.bf16.mxu0 0
        %614 = vmatpush2.bf16.xpose.msra.mxu0 0
        %615 = vmatprep.subr.bf16.mxu0 0
        %616 = vmatpush2.bf16.xpose.msra.mxu0 0
        %617 = vmatprep.subr.bf16.mxu0 0
        %618 = vmatpush2.bf16.xpose.msra.mxu0 0
        %619 = vmatprep.subr.bf16.mxu0 0
        %620 = vmatpush2.bf16.xpose.msra.mxu0 0
        %621 = vmatprep.subr.bf16.mxu0 0
        %622 = vmatpush2.bf16.xpose.msra.mxu0 0
        %623 = vmatprep.subr.bf16.mxu0 0
        %624 = vmatpush2.bf16.xpose.msra.mxu0 0
        %625 = vmatprep.subr.bf16.mxu0 0
        %626 = vmatpush2.bf16.xpose.msra.mxu0 0
        %627 = vmatprep.subr.bf16.mxu0 0
        %628 = vmatpush2.bf16.xpose.msra.mxu0 0
        %629 = vmatprep.mubr.bf16.mxu0 0
        %630 = vmatmul.mubr.bf16.gmra.mxu0 %v592
        %v631 = vpop.f32.mrf.mxu0
        %v632 = vadd.f32 0.0, %v631
        %v633 = vpop.f32.mrf.mxu0
        %v634 = vpop.f32.mrf.mxu0
        %v635 = vpop.f32.mrf.mxu0
        %636 = vdwg.mxu0
        %vm637 = vcmask 130048
        %v638 = vsel %vm637, %v632, -inf
        %639 = vmax.xlane.f32.xlu0 %v638
        %v640 = vpop.xlane.xlu0 %639
        %v641 = vsub.f32 %v632, %v640
        %v642 = vpow.pop %v641
        %v643 = vsel %vm637, %v642, 0.0
        %644 = vadd.xlane.f32.xlu0 %v643
        %v645 = vpop.xlane.xlu0 %644
        %v646 = vpack.c.bf16 %v642, %v642
        %647 = vrot.lane.b32.xlu0 %v589, 96
        %v648 = vpop.permute.xlu0 %647
        %v651 = vsel %vm637, %v646, 0
        %653 = vmatprep.subr.bf16.mxu0 0
        %654 = vmatpush1.bf16.msra.mxu0 0
        %655 = vmatprep.subr.bf16.mxu0 0
        %656 = vmatpush1.bf16.msra.mxu0 0
        %657 = vmatprep.subr.bf16.mxu0 0
        %658 = vmatpush1.bf16.msra.mxu0 0
        %659 = vmatprep.subr.bf16.mxu0 0
        %660 = vmatpush1.bf16.msra.mxu0 0
        %661 = vmatprep.subr.bf16.mxu0 0
        %662 = vmatpush1.bf16.msra.mxu0 0
        %663 = vmatprep.subr.bf16.mxu0 0
        %664 = vmatpush1.bf16.msra.mxu0 0
        %665 = vmatprep.subr.bf16.mxu0 0
        %666 = vmatpush1.bf16.msra.mxu0 0
        %667 = vmatprep.subr.bf16.mxu0 0
        %668 = vmatpush1.bf16.msra.mxu0 %v648
        %669 = vmatprep.subr.bf16.mxu0 0
        %670 = vmatpush2.bf16.msra.mxu0 0
        %671 = vmatprep.subr.bf16.mxu0 0
        %672 = vmatpush2.bf16.msra.mxu0 0
        %673 = vmatprep.subr.bf16.mxu0 0
        %674 = vmatpush2.bf16.msra.mxu0 0
        %675 = vmatprep.subr.bf16.mxu0 0
        %676 = vmatpush2.bf16.msra.mxu0 0
        %677 = vmatprep.subr.bf16.mxu0 0
        %678 = vmatpush2.bf16.msra.mxu0 0
        %679 = vmatprep.subr.bf16.mxu0 0
        %680 = vmatpush2.bf16.msra.mxu0 0
        %681 = vmatprep.subr.bf16.mxu0 0
        %682 = vmatpush2.bf16.msra.mxu0 0
        %683 = vmatprep.subr.bf16.mxu0 0
        %684 = vmatpush2.bf16.msra.mxu0 0
        %685 = vmatprep.mubr.bf16.mxu0 0
        %686 = vmatmul.mubr.bf16.gmra.mxu0 %v651
        %v687 = vpop.f32.mrf.mxu0
        %v688 = vadd.f32 0.0, %v687
        %v689 = vpop.f32.mrf.mxu0
        %v690 = vpop.f32.mrf.mxu0
        %v691 = vpop.f32.mrf.mxu0
        %692 = vdwg.mxu0
        %v693 = vrcp.pop %v645
        %v694 = vmul.f32 %v688, %v693
        %695 = vst.msk [vmem:[#allocation3] sm:$0xff] %vm590, %v694
        %v696 = vld [vmem:[#allocation2] sm:$0xf]
        %v697 = vld [vmem:[#allocation2 + $0x4] sm:$0xf]
        %699 = vrot.lane.b32.xlu0 %v582, 120
        %v700 = vpop.permute.xlu0 %699
        %v703 = vunpack.c.l.b16 %v696
        %v704 = vunpack.c.l.b16 %v697
        %v705 = vpack.c.b16 %v704, %v703
        %706 = vrot.lane.b32.xlu0 %v705, 120
        %v707 = vpop.permute.xlu0 %706
        %v709 = vsel %vm590, %v700, 0
        %v712 = vsel %vm590, %v707, 0
        %714 = vmatprep.subr.bf16.mxu0 0
        %715 = vmatpush1.bf16.xpose.msra.mxu0 0
        %716 = vmatprep.subr.bf16.mxu0 0
        %717 = vmatpush1.bf16.xpose.msra.mxu0 0
        %718 = vmatprep.subr.bf16.mxu0 0
        %719 = vmatpush1.bf16.xpose.msra.mxu0 0
        %720 = vmatprep.subr.bf16.mxu0 0
        %721 = vmatpush1.bf16.xpose.msra.mxu0 0
        %722 = vmatprep.subr.bf16.mxu0 0
        %723 = vmatpush1.bf16.xpose.msra.mxu0 0
        %724 = vmatprep.subr.bf16.mxu0 0
        %725 = vmatpush1.bf16.xpose.msra.mxu0 0
        %726 = vmatprep.subr.bf16.mxu0 0
        %727 = vmatpush1.bf16.xpose.msra.mxu0 0
        %728 = vmatprep.subr.bf16.mxu0 0
        %729 = vmatpush1.bf16.xpose.msra.mxu0 %v712
        %730 = vmatprep.subr.bf16.mxu0 0
        %731 = vmatpush2.bf16.xpose.msra.mxu0 0
        %732 = vmatprep.subr.bf16.mxu0 0
        %733 = vmatpush2.bf16.xpose.msra.mxu0 0
        %734 = vmatprep.subr.bf16.mxu0 0
        %735 = vmatpush2.bf16.xpose.msra.mxu0 0
        %736 = vmatprep.subr.bf16.mxu0 0
        %737 = vmatpush2.bf16.xpose.msra.mxu0 0
        %738 = vmatprep.subr.bf16.mxu0 0
        %739 = vmatpush2.bf16.xpose.msra.mxu0 0
        %740 = vmatprep.subr.bf16.mxu0 0
        %741 = vmatpush2.bf16.xpose.msra.mxu0 0
        %742 = vmatprep.subr.bf16.mxu0 0
        %743 = vmatpush2.bf16.xpose.msra.mxu0 0
        %744 = vmatprep.subr.bf16.mxu0 0
        %745 = vmatpush2.bf16.xpose.msra.mxu0 0
        %746 = vmatprep.mubr.bf16.mxu0 0
        %747 = vmatmul.mubr.bf16.gmra.mxu0 %v709
        %v748 = vpop.f32.mrf.mxu0
        %v749 = vadd.f32 0.0, %v748
        %v750 = vpop.f32.mrf.mxu0
        %v751 = vpop.f32.mrf.mxu0
        %v752 = vpop.f32.mrf.mxu0
        %753 = vdwg.mxu0
        %v754 = vsel %vm637, %v749, -inf
        %755 = vmax.xlane.f32.xlu0 %v754
        %v756 = vpop.xlane.xlu0 %755
        %v757 = vsub.f32 %v749, %v756
        %v758 = vpow.pop %v757
        %v759 = vsel %vm637, %v758, 0.0
        %760 = vadd.xlane.f32.xlu0 %v759
        %v761 = vpop.xlane.xlu0 %760
        %v762 = vpack.c.bf16 %v758, %v758
        %763 = vrot.lane.b32.xlu0 %v705, 88
        %v764 = vpop.permute.xlu0 %763
        %v767 = vsel %vm637, %v762, 0
        %769 = vmatprep.subr.bf16.mxu0 0
        %770 = vmatpush1.bf16.msra.mxu0 0
        %771 = vmatprep.subr.bf16.mxu0 0
        %772 = vmatpush1.bf16.msra.mxu0 0
        %773 = vmatprep.subr.bf16.mxu0 0
        %774 = vmatpush1.bf16.msra.mxu0 0
        %775 = vmatprep.subr.bf16.mxu0 0
        %776 = vmatpush1.bf16.msra.mxu0 0
        %777 = vmatprep.subr.bf16.mxu0 0
        %778 = vmatpush1.bf16.msra.mxu0 0
        %779 = vmatprep.subr.bf16.mxu0 0
        %780 = vmatpush1.bf16.msra.mxu0 0
        %781 = vmatprep.subr.bf16.mxu0 0
        %782 = vmatpush1.bf16.msra.mxu0 0
        %783 = vmatprep.subr.bf16.mxu0 0
        %784 = vmatpush1.bf16.msra.mxu0 %v764
        %785 = vmatprep.subr.bf16.mxu0 0
        %786 = vmatpush2.bf16.msra.mxu0 0
        %787 = vmatprep.subr.bf16.mxu0 0
        %788 = vmatpush2.bf16.msra.mxu0 0
        %789 = vmatprep.subr.bf16.mxu0 0
        %790 = vmatpush2.bf16.msra.mxu0 0
        %791 = vmatprep.subr.bf16.mxu0 0
        %792 = vmatpush2.bf16.msra.mxu0 0
        %793 = vmatprep.subr.bf16.mxu0 0
        %794 = vmatpush2.bf16.msra.mxu0 0
        %795 = vmatprep.subr.bf16.mxu0 0
        %796 = vmatpush2.bf16.msra.mxu0 0
        %797 = vmatprep.subr.bf16.mxu0 0
        %798 = vmatpush2.bf16.msra.mxu0 0
        %799 = vmatprep.subr.bf16.mxu0 0
        %800 = vmatpush2.bf16.msra.mxu0 0
        %801 = vmatprep.mubr.bf16.mxu0 0
        %802 = vmatmul.mubr.bf16.gmra.mxu0 %v767
        %v803 = vpop.f32.mrf.mxu0
        %v804 = vadd.f32 0.0, %v803
        %v805 = vpop.f32.mrf.mxu0
        %v806 = vpop.f32.mrf.mxu0
        %v807 = vpop.f32.mrf.mxu0
        %808 = vdwg.mxu0
        %v809 = vrcp.pop %v761
        %v810 = vmul.f32 %v804, %v809
        %812 = vrot.lane.b32.xlu0 %v810, 8
        %v813 = vpop.permute.xlu0 %812
        %vm815 = vcmask 130112
        %816 = vst.msk [vmem:[#allocation3] sm:$0xff] %vm815, %v813
        %v817 = vld [vmem:[#allocation2] sm:$0xf]
        %v818 = vld [vmem:[#allocation2 + $0x4] sm:$0xf]
        %819 = vrot.lane.b32.xlu0 %v582, 112
        %v820 = vpop.permute.xlu0 %819
        %v823 = vunpack.c.l.b16 %v817
        %v824 = vunpack.c.l.b16 %v818
        %v825 = vpack.c.b16 %v824, %v823
        %826 = vrot.lane.b32.xlu0 %v825, 112
        %v827 = vpop.permute.xlu0 %826
        %v829 = vsel %vm590, %v820, 0
        %v832 = vsel %vm590, %v827, 0
        %834 = vmatprep.subr.bf16.mxu0 0
        %835 = vmatpush1.bf16.xpose.msra.mxu0 0
        %836 = vmatprep.subr.bf16.mxu0 0
        %837 = vmatpush1.bf16.xpose.msra.mxu0 0
        %838 = vmatprep.subr.bf16.mxu0 0
        %839 = vmatpush1.bf16.xpose.msra.mxu0 0
        %840 = vmatprep.subr.bf16.mxu0 0
        %841 = vmatpush1.bf16.xpose.msra.mxu0 0
        %842 = vmatprep.subr.bf16.mxu0 0
        %843 = vmatpush1.bf16.xpose.msra.mxu0 0
        %844 = vmatprep.subr.bf16.mxu0 0
        %845 = vmatpush1.bf16.xpose.msra.mxu0 0
        %846 = vmatprep.subr.bf16.mxu0 0
        %847 = vmatpush1.bf16.xpose.msra.mxu0 0
        %848 = vmatprep.subr.bf16.mxu0 0
        %849 = vmatpush1.bf16.xpose.msra.mxu0 %v832
        %850 = vmatprep.subr.bf16.mxu0 0
        %851 = vmatpush2.bf16.xpose.msra.mxu0 0
        %852 = vmatprep.subr.bf16.mxu0 0
        %853 = vmatpush2.bf16.xpose.msra.mxu0 0
        %854 = vmatprep.subr.bf16.mxu0 0
        %855 = vmatpush2.bf16.xpose.msra.mxu0 0
        %856 = vmatprep.subr.bf16.mxu0 0
        %857 = vmatpush2.bf16.xpose.msra.mxu0 0
        %858 = vmatprep.subr.bf16.mxu0 0
        %859 = vmatpush2.bf16.xpose.msra.mxu0 0
        %860 = vmatprep.subr.bf16.mxu0 0
        %861 = vmatpush2.bf16.xpose.msra.mxu0 0
        %862 = vmatprep.subr.bf16.mxu0 0
        %863 = vmatpush2.bf16.xpose.msra.mxu0 0
        %864 = vmatprep.subr.bf16.mxu0 0
        %865 = vmatpush2.bf16.xpose.msra.mxu0 0
        %866 = vmatprep.mubr.bf16.mxu0 0
        %867 = vmatmul.mubr.bf16.gmra.mxu0 %v829
        %v868 = vpop.f32.mrf.mxu0
        %v869 = vadd.f32 0.0, %v868
        %v870 = vpop.f32.mrf.mxu0
        %v871 = vpop.f32.mrf.mxu0
        %v872 = vpop.f32.mrf.mxu0
        %873 = vdwg.mxu0
        %v874 = vsel %vm637, %v869, -inf
        %875 = vmax.xlane.f32.xlu0 %v874
        %v876 = vpop.xlane.xlu0 %875
        %v877 = vsub.f32 %v869, %v876
        %v878 = vpow.pop %v877
        %v879 = vsel %vm637, %v878, 0.0
        %880 = vadd.xlane.f32.xlu0 %v879
        %v881 = vpop.xlane.xlu0 %880
        %v882 = vpack.c.bf16 %v878, %v878
        %883 = vrot.lane.b32.xlu0 %v825, 80
        %v884 = vpop.permute.xlu0 %883
        %v887 = vsel %vm637, %v882, 0
        %889 = vmatprep.subr.bf16.mxu0 0
        %890 = vmatpush1.bf16.msra.mxu0 0
        %891 = vmatprep.subr.bf16.mxu0 0
        %892 = vmatpush1.bf16.msra.mxu0 0
        %893 = vmatprep.subr.bf16.mxu0 0
        %894 = vmatpush1.bf16.msra.mxu0 0
        %895 = vmatprep.subr.bf16.mxu0 0
        %896 = vmatpush1.bf16.msra.mxu0 0
        %897 = vmatprep.subr.bf16.mxu0 0
        %898 = vmatpush1.bf16.msra.mxu0 0
        %899 = vmatprep.subr.bf16.mxu0 0
        %900 = vmatpush1.bf16.msra.mxu0 0
        %901 = vmatprep.subr.bf16.mxu0 0
        %902 = vmatpush1.bf16.msra.mxu0 0
        %903 = vmatprep.subr.bf16.mxu0 0
        %904 = vmatpush1.bf16.msra.mxu0 %v884
        %905 = vmatprep.subr.bf16.mxu0 0
        %906 = vmatpush2.bf16.msra.mxu0 0
        %907 = vmatprep.subr.bf16.mxu0 0
        %908 = vmatpush2.bf16.msra.mxu0 0
        %909 = vmatprep.subr.bf16.mxu0 0
        %910 = vmatpush2.bf16.msra.mxu0 0
        %911 = vmatprep.subr.bf16.mxu0 0
        %912 = vmatpush2.bf16.msra.mxu0 0
        %913 = vmatprep.subr.bf16.mxu0 0
        %914 = vmatpush2.bf16.msra.mxu0 0
        %915 = vmatprep.subr.bf16.mxu0 0
        %916 = vmatpush2.bf16.msra.mxu0 0
        %917 = vmatprep.subr.bf16.mxu0 0
        %918 = vmatpush2.bf16.msra.mxu0 0
        %919 = vmatprep.subr.bf16.mxu0 0
        %920 = vmatpush2.bf16.msra.mxu0 0
        %921 = vmatprep.mubr.bf16.mxu0 0
        %922 = vmatmul.mubr.bf16.gmra.mxu0 %v887
        %v923 = vpop.f32.mrf.mxu0
        %v924 = vadd.f32 0.0, %v923
        %v925 = vpop.f32.mrf.mxu0
        %v926 = vpop.f32.mrf.mxu0
        %v927 = vpop.f32.mrf.mxu0
        %928 = vdwg.mxu0
        %v929 = vrcp.pop %v881
        %v930 = vmul.f32 %v924, %v929
        %932 = vrot.lane.b32.xlu0 %v930, 16
        %v933 = vpop.permute.xlu0 %932
        %vm935 = vcmask 195712
        %936 = vst.msk [vmem:[#allocation3] sm:$0xff] %vm935, %v933
        %v937 = vld [vmem:[#allocation2] sm:$0xf]
        %v938 = vld [vmem:[#allocation2 + $0x4] sm:$0xf]
        %939 = vrot.lane.b32.xlu0 %v582, 104
        %v940 = vpop.permute.xlu0 %939
        %v943 = vunpack.c.l.b16 %v937
        %v944 = vunpack.c.l.b16 %v938
        %v945 = vpack.c.b16 %v944, %v943
        %946 = vrot.lane.b32.xlu0 %v945, 104
        %v947 = vpop.permute.xlu0 %946
        %v949 = vsel %vm590, %v940, 0
        %v952 = vsel %vm590, %v947, 0
        %954 = vmatprep.subr.bf16.mxu0 0
        %955 = vmatpush1.bf16.xpose.msra.mxu0 0
        %956 = vmatprep.subr.bf16.mxu0 0
        %957 = vmatpush1.bf16.xpose.msra.mxu0 0
        %958 = vmatprep.subr.bf16.mxu0 0
        %959 = vmatpush1.bf16.xpose.msra.mxu0 0
        %960 = vmatprep.subr.bf16.mxu0 0
        %961 = vmatpush1.bf16.xpose.msra.mxu0 0
        %962 = vmatprep.subr.bf16.mxu0 0
        %963 = vmatpush1.bf16.xpose.msra.mxu0 0
        %964 = vmatprep.subr.bf16.mxu0 0
        %965 = vmatpush1.bf16.xpose.msra.mxu0 0
        %966 = vmatprep.subr.bf16.mxu0 0
        %967 = vmatpush1.bf16.xpose.msra.mxu0 0
        %968 = vmatprep.subr.bf16.mxu0 0
        %969 = vmatpush1.bf16.xpose.msra.mxu0 %v952
        %970 = vmatprep.subr.bf16.mxu0 0
        %971 = vmatpush2.bf16.xpose.msra.mxu0 0
        %972 = vmatprep.subr.bf16.mxu0 0
        %973 = vmatpush2.bf16.xpose.msra.mxu0 0
        %974 = vmatprep.subr.bf16.mxu0 0
        %975 = vmatpush2.bf16.xpose.msra.mxu0 0
        %976 = vmatprep.subr.bf16.mxu0 0
        %977 = vmatpush2.bf16.xpose.msra.mxu0 0
        %978 = vmatprep.subr.bf16.mxu0 0
        %979 = vmatpush2.bf16.xpose.msra.mxu0 0
        %980 = vmatprep.subr.bf16.mxu0 0
        %981 = vmatpush2.bf16.xpose.msra.mxu0 0
        %982 = vmatprep.subr.bf16.mxu0 0
        %983 = vmatpush2.bf16.xpose.msra.mxu0 0
        %984 = vmatprep.subr.bf16.mxu0 0
        %985 = vmatpush2.bf16.xpose.msra.mxu0 0
        %986 = vmatprep.mubr.bf16.mxu0 0
        %987 = vmatmul.mubr.bf16.gmra.mxu0 %v949
        %v988 = vpop.f32.mrf.mxu0
        %v989 = vadd.f32 0.0, %v988
        %v990 = vpop.f32.mrf.mxu0
        %v991 = vpop.f32.mrf.mxu0
        %v992 = vpop.f32.mrf.mxu0
        %993 = vdwg.mxu0
        %v994 = vsel %vm637, %v989, -inf
        %995 = vmax.xlane.f32.xlu0 %v994
        %v996 = vpop.xlane.xlu0 %995
        %v997 = vsub.f32 %v989, %v996
        %v998 = vpow.pop %v997
        %v999 = vsel %vm637, %v998, 0.0
        %1000 = vadd.xlane.f32.xlu0 %v999
        %v1001 = vpop.xlane.xlu0 %1000
        %v1002 = vpack.c.bf16 %v998, %v998
        %1003 = vrot.lane.b32.xlu0 %v945, 72
        %v1004 = vpop.permute.xlu0 %1003
        %v1007 = vsel %vm637, %v1002, 0
        %1009 = vmatprep.subr.bf16.mxu0 0
        %1010 = vmatpush1.bf16.msra.mxu0 0
        %1011 = vmatprep.subr.bf16.mxu0 0
        %1012 = vmatpush1.bf16.msra.mxu0 0
        %1013 = vmatprep.subr.bf16.mxu0 0
        %1014 = vmatpush1.bf16.msra.mxu0 0
        %1015 = vmatprep.subr.bf16.mxu0 0
        %1016 = vmatpush1.bf16.msra.mxu0 0
        %1017 = vmatprep.subr.bf16.mxu0 0
        %1018 = vmatpush1.bf16.msra.mxu0 0
        %1019 = vmatprep.subr.bf16.mxu0 0
        %1020 = vmatpush1.bf16.msra.mxu0 0
        %1021 = vmatprep.subr.bf16.mxu0 0
        %1022 = vmatpush1.bf16.msra.mxu0 0
        %1023 = vmatprep.subr.bf16.mxu0 0
        %1024 = vmatpush1.bf16.msra.mxu0 %v1004
        %1025 = vmatprep.subr.bf16.mxu0 0
        %1026 = vmatpush2.bf16.msra.mxu0 0
        %1027 = vmatprep.subr.bf16.mxu0 0
        %1028 = vmatpush2.bf16.msra.mxu0 0
        %1029 = vmatprep.subr.bf16.mxu0 0
        %1030 = vmatpush2.bf16.msra.mxu0 0
        %1031 = vmatprep.subr.bf16.mxu0 0
        %1032 = vmatpush2.bf16.msra.mxu0 0
        %1033 = vmatprep.subr.bf16.mxu0 0
        %1034 = vmatpush2.bf16.msra.mxu0 0
        %1035 = vmatprep.subr.bf16.mxu0 0
        %1036 = vmatpush2.bf16.msra.mxu0 0
        %1037 = vmatprep.subr.bf16.mxu0 0
        %1038 = vmatpush2.bf16.msra.mxu0 0
        %1039 = vmatprep.subr.bf16.mxu0 0
        %1040 = vmatpush2.bf16.msra.mxu0 0
        %1041 = vmatprep.mubr.bf16.mxu0 0
        %1042 = vmatmul.mubr.bf16.gmra.mxu0 %v1007
        %v1043 = vpop.f32.mrf.mxu0
        %v1044 = vadd.f32 0.0, %v1043
        %v1045 = vpop.f32.mrf.mxu0
        %v1046 = vpop.f32.mrf.mxu0
        %v1047 = vpop.f32.mrf.mxu0
        %1048 = vdwg.mxu0
        %v1049 = vrcp.pop %v1001
        %v1050 = vmul.f32 %v1044, %v1049
        %1052 = vrot.lane.b32.xlu0 %v1050, 24
        %v1053 = vpop.permute.xlu0 %1052
        %vm1055 = vcmask 261312
        %1056 = vst.msk [vmem:[#allocation3] sm:$0xff] %vm1055, %v1053
        %v1057 = vld [vmem:[#allocation3] sm:$0xff]
        %v1058 = vpack.c.bf16 %v1057, %v1057
        %v1059 = vld [vmem:[#allocation12] sm:$0xf]
        %v1060 = vld [vmem:[#allocation12 + $0x4] sm:$0xf]
        %v1061 = vld [vmem:[#allocation12 + $0x8] sm:$0xf]
        %v1062 = vld [vmem:[#allocation12 + $0xc] sm:$0xf]
        %v1063 = vld [vmem:[%s7] sm:$0x1]
        %v1065 = vlaneseq
        %v1066 = vshrl.u32 %v1065, 7
        %v1067 = vsub.s32 0, %v1066
        %v1068 = vrot.slane %v1063, %v1067
        %v1074 = vunpack.c.l.b16 %v1059
        %v1075 = vunpack.c.l.b16 %v1060
        %v1076 = vunpack.c.l.b16 %v1061
        %v1077 = vunpack.c.l.b16 %v1062
        %v1078 = vpack.c.b16 %v1075, %v1074
        %v1079 = vpack.c.b16 %v1077, %v1076
        %v1083 = vsel %vm538, %v1058, 0
        %1085 = vmatprep.subr.bf16.mxu0 0
        %1086 = vmatpush1.bf16.msra.mxu0 0
        %1087 = vmatprep.subr.bf16.mxu0 0
        %1088 = vmatpush1.bf16.msra.mxu0 0
        %1089 = vmatprep.subr.bf16.mxu0 0
        %1090 = vmatpush1.bf16.msra.mxu0 0
        %1091 = vmatprep.subr.bf16.mxu0 0
        %1092 = vmatpush1.bf16.msra.mxu0 0
        %1093 = vmatprep.subr.bf16.mxu0 0
        %1094 = vmatpush1.bf16.msra.mxu0 0
        %1095 = vmatprep.subr.bf16.mxu0 0
        %1096 = vmatpush1.bf16.msra.mxu0 0
        %1097 = vmatprep.subr.bf16.mxu0 0
        %1098 = vmatpush1.bf16.msra.mxu0 %v1079
        %1099 = vmatprep.subr.bf16.mxu0 0
        %1100 = vmatpush1.bf16.msra.mxu0 %v1078
        %1101 = vmatprep.subr.bf16.mxu0 0
        %1102 = vmatpush2.bf16.msra.mxu0 0
        %1103 = vmatprep.subr.bf16.mxu0 0
        %1104 = vmatpush2.bf16.msra.mxu0 0
        %1105 = vmatprep.subr.bf16.mxu0 0
        %1106 = vmatpush2.bf16.msra.mxu0 0
        %1107 = vmatprep.subr.bf16.mxu0 0
        %1108 = vmatpush2.bf16.msra.mxu0 0
        %1109 = vmatprep.subr.bf16.mxu0 0
        %1110 = vmatpush2.bf16.msra.mxu0 0
        %1111 = vmatprep.subr.bf16.mxu0 0
        %1112 = vmatpush2.bf16.msra.mxu0 0
        %1113 = vmatprep.subr.bf16.mxu0 0
        %1114 = vmatpush2.bf16.msra.mxu0 0
        %1115 = vmatprep.subr.bf16.mxu0 0
        %1116 = vmatpush2.bf16.msra.mxu0 0
        %1117 = vmatprep.mubr.bf16.mxu0 0
        %1118 = vmatmul.mubr.bf16.gmra.mxu0 %v1083
        %v1119 = vpop.f32.mrf.mxu0
        %v1120 = vadd.f32 %v1068, %v1119
        %v1121 = vpop.f32.mrf.mxu0
        %v1122 = vpop.f32.mrf.mxu0
        %v1123 = vpop.f32.mrf.mxu0
        %1124 = vdwg.mxu0
        %v1125 = vadd.f32 %v513, %v1120
        %1126 = vst.msk [vmem:[%s421] sm:$0xff] %vm538, %v1125
        %s1127 = sand.u32 %s231, 1
        %s1128 = scalar_lea.sflag [#allocation6], %s1127
        %s1129 = sand.u32 %s231, 1
        %s1130 = smul.addr %s1129, 8
        %s1131 = scalar_lea.vmem [#allocation13], %s1130
        // Predicated region
        $region77: #{tpu_custom_call.1} parent=51 // pred_check
          %p1132 = pneg %p241
        $region78: #{tpu_custom_call.1} parent=51 // pred_check_branch
          %1134 = sbr.rel (%p1132) target = $region80
        $region79: #{tpu_custom_call.1} parent=51 // pred_region
          %s1136 = ssub.s32 128, 128
          %1137 = vsyncadd %s1128, %s1136
          %s1138 = smul.addr %s33, 2
          %s1139 = sadd.s32 %s34, %s1138
          %s1140 = smul.addr %s1139, 128
          %s1141 = scalar_lea.hbm %s8, %s1140
          %s1143 = sshll.u32 %s1131, 4
          %s1144 = int_to_ptr.vmem [resolvable:$true] %s1143
          %1146 = dma.vmem_to_hbm [thread:$0]  %s1144, 128, %s1141, %s1128
        $region80: #{tpu_custom_call.1} parent=51 // pred_fallthru
          _
      $region52: #{tpu_custom_call.1} parent=5 // pred_fallthru
        _
      %p1147 = scmp.le.s32.totalorder 2, %s24
      // Predicated region
      $region81: #{tpu_custom_call.1} parent=5 // pred_check
        %p1148 = pneg %p1147
      $region82: #{tpu_custom_call.1} parent=5 // pred_check_branch
        %1150 = sbr.rel (%p1148) target = $region84
      $region83: #{tpu_custom_call.1} parent=5 // pred_region
        %s1151 = ssub.s32 %s24, 2
        // Predicated region
        $region85: #{tpu_custom_call.1} parent=83 // pred_check
          %p1152 = pneg %p247
        $region86: #{tpu_custom_call.1} parent=83 // pred_check_branch
          %1154 = sbr.rel (%p1152) target = $region88
        $region87: #{tpu_custom_call.1} parent=83 // pred_region
          %s1155 = sand.u32 %s232, 1
          %s1156 = scalar_lea.sflag [#allocation6], %s1155
          %s1157 = sand.u32 %s232, 1
          %s1158 = smul.addr %s1157, 8
          %s1159 = scalar_lea.vmem [#allocation13], %s1158
          %1160 = dma.done %s1156, 128
        $region88: #{tpu_custom_call.1} parent=83 // pred_fallthru
          _
      $region84: #{tpu_custom_call.1} parent=5 // pred_fallthru
        _
    $region6: #{tpu_custom_call.1} parent=1 // loop_footer
      %s28 = sadd.s32 1, %s24
    $region7: #{tpu_custom_call.1} parent=1 // loop_footer_branch
      %23 = sbr.rel target = $region3
    $region8: #{tpu_custom_call.1} parent=1 // loop_exit
      _
    %1161 = vsyncpa [#allocation5], 1
    %s1162 = scalar_lea.sflag [#allocation5], 1
    %1163 = vsyncpa %s1162, 1
    %1164 = vsyncpa [#allocation8], 1
    %s1165 = scalar_lea.sflag [#allocation8], 1
    %1166 = vsyncpa %s1165, 1
    %1167 = vsyncpa [#allocation11], 1
    %1168 = vsyncpa [#allocation6], 1
    %s1169 = scalar_lea.sflag [#allocation6], 1
    %1170 = vsyncpa %s1169, 1

</llo_original>
